<compile_context>
chip_gen: v5e
topology: v5e:2x2
jax: 0.10.0
libtpu: 0.0.40
codegen_flags: <defaults>
</compile_context>

<pallas_src>
import jax
import jax.numpy as jnp
from jax.experimental import pallas as pl
from jax.experimental.pallas import tpu as pltpu

IN_FEATURES = 512 * 512 * 3          # 786432
OUT_FEATURES = 2

LANE = 512                            # lane width of the reshaped K axis (mult of 128)
ROWS = IN_FEATURES // LANE            # 1536 sublane-rows of K
P_SPLIT = 2                           # parallel split of K (uses both TCs on v7x)
TROWS = 192                           # rows per reduction step (multiple of 8)
STEPS = ROWS // (P_SPLIT * TROWS)     # 4 reduction steps per K-half
assert ROWS == P_SPLIT * TROWS * STEPS


def _linear_kernel(x_ref, w_ref, o_ref, acc_ref):
    # grid = (P_SPLIT, STEPS); reduction axis (k) is last.
    k = pl.program_id(1)

    @pl.when(k == 0)
    def _():
        acc_ref[...] = jnp.zeros_like(acc_ref)

    x = x_ref[...]                                   # (B, TROWS, LANE)  f32
    w = w_ref[...]                                   # (OUT, TROWS, LANE) f32

    # VPU multiply + XLU reduces per output feature (OUT=2, static unroll).
    parts = []
    for o in range(OUT_FEATURES):
        prod = x * w[o:o + 1]                        # (B, TROWS, LANE)  VALU
        s = jnp.sum(prod, axis=1)                    # sublane reduce -> (B, LANE)
        s = jnp.sum(s, axis=-1, keepdims=True)       # lane reduce    -> (B, 1)
        parts.append(s)
    acc_ref[...] += jnp.concatenate(parts, axis=-1)  # (B, OUT)

    @pl.when(k == pl.num_programs(1) - 1)
    def _():
        o_ref[...] = acc_ref[...].astype(o_ref.dtype)


def mock_model_forward(x, weight, bias):
    """x: (B, 3, 512, 512) f32; weight: (OUT, K) f32 (PyTorch layout); bias: (OUT,)."""
    B = x.shape[0]
    assert weight.shape == (OUT_FEATURES, IN_FEATURES)

    # Free, layout-preserving (row-major) reshapes — same data as torch's x.view(B, -1).
    x3 = x.reshape(B, ROWS, LANE)
    w3 = weight.reshape(OUT_FEATURES, ROWS, LANE)

    partial = pl.pallas_call(
        _linear_kernel,
        out_shape=jax.ShapeDtypeStruct((P_SPLIT, B, OUT_FEATURES), jnp.float32),
        grid_spec=pltpu.PrefetchScalarGridSpec(
            num_scalar_prefetch=0,
            grid=(P_SPLIT, STEPS),
            in_specs=[
                # x tile: (B, TROWS, LANE) — sublane- and lane-dense.
                pl.BlockSpec((B, TROWS, LANE),
                             lambda p, k: (0, p * STEPS + k, 0)),
                # weight tile: (OUT, TROWS, LANE) — native PyTorch layout, lane-dense.
                pl.BlockSpec((OUT_FEATURES, TROWS, LANE),
                             lambda p, k: (0, p * STEPS + k, 0)),
            ],
            # One (B, OUT) partial-sum block per K-half; leading dim squeezed.
            out_specs=pl.BlockSpec((None, B, OUT_FEATURES),
                                   lambda p, k: (p, 0, 0)),
            scratch_shapes=[pltpu.VMEM((B, OUT_FEATURES), jnp.float32)],
        ),
        compiler_params=pltpu.CompilerParams(
            dimension_semantics=("parallel", "arbitrary"),
        ),
    )(x3, w3)

    # Combine the K-halves and add the bias outside the kernel (tiny tensors).
    out = partial.sum(axis=0) + bias[None, :]
    return out.astype(x.dtype)


if __name__ == "__main__":
    key = jax.random.PRNGKey(0)
    kx, kw, kb = jax.random.split(key, 3)

    B = 2
    # Deterministic parameter init (mimics PyTorch's uniform(-1/sqrt(K), 1/sqrt(K)))
    bound = 1.0 / (IN_FEATURES ** 0.5)
    weight = jax.random.uniform(
        kw, (OUT_FEATURES, IN_FEATURES), jnp.float32, minval=-bound, maxval=bound
    )
    bias = jax.random.uniform(
        kb, (OUT_FEATURES,), jnp.float32, minval=-bound, maxval=bound
    )
    x = jax.random.normal(kx, (B, 3, 512, 512), jnp.float32)

    out = jax.block_until_ready(mock_model_forward(x, weight, bias))

    # Reference check in plain JAX
    ref = x.reshape(B, -1) @ weight.T + bias
    assert out.shape == (B, OUT_FEATURES)
    assert jnp.allclose(out, ref, atol=1e-3, rtol=1e-3), (out, ref)

    print("KERNEL_OK")
</pallas_src>

<mosaic_0001>
module attributes {stable_mosaic.version = 11 : i64} {
  func.func @_linear_kernel(%arg0: i32, %arg1: i32, %arg2: memref<2x192x512xf32, #tpu.memory_space<vmem>>, %arg3: memref<2x192x512xf32, #tpu.memory_space<vmem>>, %arg4: memref<1x2x2xf32, #tpu.memory_space<vmem>>, %arg5: memref<2x2xf32, #tpu.memory_space<vmem>>) attributes {dimension_semantics = [#tpu.dimension_semantics<parallel>, #tpu.dimension_semantics<arbitrary>], iteration_bounds = array<i64: 2, 4>, scalar_prefetch = 0 : i64, scratch_operands = 1 : i64, tpu.core_type = #tpu.core_type<tc>, window_params = [{transform_indices = @transform_0, window_bounds = array<i64: 2, 192, 512>}, {transform_indices = @transform_1, window_bounds = array<i64: 2, 192, 512>}, {transform_indices = @transform_2, window_bounds = array<i64: 1, 2, 2>}]} {
    %c0_i32 = arith.constant 0 : i32
    %0 = arith.cmpi eq, %arg1, %c0_i32 : i32
    %1 = arith.extui %0 : i1 to i32
    %c0_i32_0 = arith.constant 0 : i32
    %2 = arith.cmpi ne, %1, %c0_i32_0 : i32
    scf.if %2 {
      %cst_14 = arith.constant 0.000000e+00 : f32
      %24 = vector.broadcast %cst_14 : f32 to vector<2x2xf32>
      %c0_15 = arith.constant 0 : index
      %c0_16 = arith.constant 0 : index
      %25 = vector.load %arg5[%c0_15, %c0_16] : memref<2x2xf32, #tpu.memory_space<vmem>>, vector<2x2xf32>
      tpu.vector_store %arg5[%c0_15, %c0_16], %24 {strides = array<i32>} : memref<2x2xf32, #tpu.memory_space<vmem>>, vector<2x2xf32>,
    } else {
    }
    %c0 = arith.constant 0 : index
    %c0_1 = arith.constant 0 : index
    %c0_2 = arith.constant 0 : index
    %3 = vector.load %arg2[%c0, %c0_1, %c0_2] : memref<2x192x512xf32, #tpu.memory_space<vmem>>, vector<2x192x512xf32>
    %c0_3 = arith.constant 0 : index
    %c0_4 = arith.constant 0 : index
    %c0_5 = arith.constant 0 : index
    %4 = vector.load %arg3[%c0_3, %c0_4, %c0_5] : memref<2x192x512xf32, #tpu.memory_space<vmem>>, vector<2x192x512xf32>
    %5 = vector.extract_strided_slice %4 {offsets = [0, 0, 0], sizes = [1, 192, 512], strides = [1, 1, 1]} : vector<2x192x512xf32> to vector<1x192x512xf32>
    %6 = vector.broadcast %5 : vector<1x192x512xf32> to vector<2x192x512xf32>
    %7 = arith.mulf %3, %6 : vector<2x192x512xf32>
    %cst = arith.constant dense<0.000000e+00> : vector<2x512xf32>
    %8 = vector.multi_reduction <add>, %7, %cst [1] : vector<2x192x512xf32> to vector<2x512xf32>
    %cst_6 = arith.constant dense<0.000000e+00> : vector<2xf32>
    %9 = vector.multi_reduction <add>, %8, %cst_6 [1] : vector<2x512xf32> to vector<2xf32>
    %10 = vector.shape_cast %9 : vector<2xf32> to vector<2x1xf32>
    %11 = vector.extract_strided_slice %4 {offsets = [1, 0, 0], sizes = [1, 192, 512], strides = [1, 1, 1]} : vector<2x192x512xf32> to vector<1x192x512xf32>
    %12 = vector.broadcast %11 : vector<1x192x512xf32> to vector<2x192x512xf32>
    %13 = arith.mulf %3, %12 : vector<2x192x512xf32>
    %cst_7 = arith.constant dense<0.000000e+00> : vector<2x512xf32>
    %14 = vector.multi_reduction <add>, %13, %cst_7 [1] : vector<2x192x512xf32> to vector<2x512xf32>
    %cst_8 = arith.constant dense<0.000000e+00> : vector<2xf32>
    %15 = vector.multi_reduction <add>, %14, %cst_8 [1] : vector<2x512xf32> to vector<2xf32>
    %16 = vector.shape_cast %15 : vector<2xf32> to vector<2x1xf32>
    %c0_9 = arith.constant 0 : index
    %c0_10 = arith.constant 0 : index
    %17 = vector.load %arg5[%c0_9, %c0_10] : memref<2x2xf32, #tpu.memory_space<vmem>>, vector<2x2xf32>
    %18 = tpu.concatenate %10, %16 in 1 : vector<2x1xf32>, vector<2x1xf32> -> vector<2x2xf32>
    %19 = arith.addf %17, %18 : vector<2x2xf32>
    %c0_11 = arith.constant 0 : index
    %c0_12 = arith.constant 0 : index
    %20 = vector.load %arg5[%c0_11, %c0_12] : memref<2x2xf32, #tpu.memory_space<vmem>>, vector<2x2xf32>
    tpu.vector_store %arg5[%c0_11, %c0_12], %19 {strides = array<i32>} : memref<2x2xf32, #tpu.memory_space<vmem>>, vector<2x2xf32>,
    %c3_i32 = arith.constant 3 : i32
    %21 = arith.cmpi eq, %arg1, %c3_i32 : i32
    %22 = arith.extui %21 : i1 to i32
    %c0_i32_13 = arith.constant 0 : i32
    %23 = arith.cmpi ne, %22, %c0_i32_13 : i32
    scf.if %23 {
      %c0_14 = arith.constant 0 : index
      %c0_15 = arith.constant 0 : index
      %24 = vector.load %arg5[%c0_14, %c0_15] : memref<2x2xf32, #tpu.memory_space<vmem>>, vector<2x2xf32>
      %c0_16 = arith.constant 0 : index
      %c0_17 = arith.constant 0 : index
      %c0_18 = arith.constant 0 : index
      %25 = vector.load %arg4[%c0_16, %c0_17, %c0_18] : memref<1x2x2xf32, #tpu.memory_space<vmem>>, vector<1x2x2xf32>
      %26 = vector.shape_cast %25 : vector<1x2x2xf32> to vector<2x2xf32>
      %27 = vector.shape_cast %24 : vector<2x2xf32> to vector<1x2x2xf32>
      tpu.vector_store %arg4[%c0_16, %c0_17, %c0_18], %27 {strides = array<i32>} : memref<1x2x2xf32, #tpu.memory_space<vmem>>, vector<1x2x2xf32>,
    } else {
    }
    return
  }
  func.func @transform_0(%arg0: i32, %arg1: i32) -> (i32, i32, i32) {
    %c4_i32 = arith.constant 4 : i32
    %0 = arith.muli %arg0, %c4_i32 : i32
    %1 = arith.addi %0, %arg1 : i32
    %c0_i32 = arith.constant 0 : i32
    %c0_i32_0 = arith.constant 0 : i32
    %c0_i32_1 = arith.constant 0 : i32
    return %c0_i32, %1, %c0_i32_0 : i32, i32, i32
  }
  func.func @transform_1(%arg0: i32, %arg1: i32) -> (i32, i32, i32) {
    %c4_i32 = arith.constant 4 : i32
    %0 = arith.muli %arg0, %c4_i32 : i32
    %1 = arith.addi %0, %arg1 : i32
    %c0_i32 = arith.constant 0 : i32
    %c0_i32_0 = arith.constant 0 : i32
    %c0_i32_1 = arith.constant 0 : i32
    return %c0_i32, %1, %c0_i32_0 : i32, i32, i32
  }
  func.func @transform_2(%arg0: i32, %arg1: i32) -> (i32, i32, i32) {
    %c0_i32 = arith.constant 0 : i32
    %c0_i32_0 = arith.constant 0 : i32
    %c0_i32_1 = arith.constant 0 : i32
    return %arg0, %c0_i32, %c0_i32_0 : i32, i32, i32
  }
}

</mosaic_0001>

<llo_original>
// kernel: tpu_custom_call.1
$region0: #{tpu_custom_call.1}
  #allocation0 [shape = 'u32[]', space=smem, size = 0x4, offset = 0x4, fixed_abs, tag = 'smem constant byte address 0x4 - core index']
  #allocation1 [shape = 'u32[72,128]{1,0:T(1,128)}', space=vmem, size = 0x9000, scoped, tag = 'internal scratch']
  #allocation2 [shape = 'f32[2,2]{1,0:T(2,128)}', space=vmem, size = 0x400, scoped, tag = 'scratch operand']
  #allocation9 [shape = 's32[]', space=sflag, size = 0x4, offset = 0, fixed_abs, tag = 'sflag constant byte address 0x0 - dummy sync flag']
  #allocation11 [shape = 's32[]', space=sflag, size = 0x4, offset = 0, fixed_abs, tag = 'sflag constant byte address 0x0 - dummy sync flag']
  %s0 = inlined_call_operand.hbm [shape: f32[2,1536,512], index: 0, kind: input, shape index: {}]
  %s1 = inlined_call_operand.hbm [shape: f32[2,1536,512], index: 1, kind: input, shape index: {}]
  %s2 = inlined_call_operand.hbm [shape: f32[2,2,2], index: 2, kind: output, shape index: {}]
  %s3 = sld [smem:[#allocation0]]
  $region57: #{tpu_custom_call.1} parent=0
    _
  %s5 = ssub.s32 1, %s3
  %s6 = scalar_select 0, %s5, %s3
  $region1: #{tpu_custom_call.1} parent=0
    #allocation3 [shape = 'u8[1572864]{0}', space=vmem, size = 0x180000, scoped, tag = 'input window, operand 0']
    #allocation4 [shape = 's32[2]{0}', space=sflag, size = 0x8, scoped, tag = 'scoped memory for tpu_custom_call.1']
    #allocation5 [shape = 's32[2]{0}', space=sflag, size = 0x8, scoped, tag = 'scoped memory for tpu_custom_call.1']
    #allocation6 [shape = 'u8[1572864]{0}', space=vmem, size = 0x180000, scoped, tag = 'input window, operand 1']
    #allocation7 [shape = 's32[2]{0}', space=sflag, size = 0x8, scoped, tag = 'scoped memory for tpu_custom_call.1']
    #allocation8 [shape = 'u8[2048]{0}', space=vmem, size = 0x800, scoped, tag = 'output window, operand 0']
    %7 = vsyncpa [#allocation4], 0
    %s8 = scalar_lea.sflag [#allocation4], 1
    %9 = vsyncpa %s8, 0
    %10 = vsyncpa [#allocation7], 0
    %s11 = scalar_lea.sflag [#allocation7], 1
    %12 = vsyncpa %s11, 0
    %13 = vsyncpa [#allocation5], 0
    %s14 = scalar_lea.sflag [#allocation5], 1
    %15 = vsyncpa %s14, 0
    loop: start=0, step=1, limit=10
    $region2: #{tpu_custom_call.1} parent=1 // loop_pre_header
      _
    $region3: #{tpu_custom_call.1} parent=1 // loop_header
      %s17 = sphi 0, %s21
      %p18 = scmp.ge.s32.totalorder %s17, 10
      %s24 = sphi 0, %s36
      %s25 = sphi 0, %s32
      %s26 = sphi 0, %s24
      %s27 = sphi 0, %s25
      %s28 = sphi 0, %s26
      %s29 = sphi 0, %s27
      %s43 = sphi 0, %s45
      %s46 = sphi 0, %s43
      %s47 = sphi 0, %s46
      %s63 = sphi 0, %s47
      %s73 = sphi 0, %s75
      %s76 = sphi 0, %s73
      %s77 = sphi 0, %s76
      %s93 = sphi 0, %s77
      %s99 = sphi 0, %s101
      %s102 = sphi 0, %s99
      %s103 = sphi 0, %s102
      %s119 = sphi 0, %s103
    $region4: #{tpu_custom_call.1} parent=1 // loop_header_branch
      %20 = sbr.rel (%p18) target = $region8
    $region5: #{tpu_custom_call.1} parent=1 // loop_body
      %s22 = ssub.s32 %s17, 1
      %s23 = ssub.s32 %s17, 2
      %s30 = sadd.s32 1, %s25
      %p31 = scmp.ge.s32.totalorder %s30, 4
      %s32 = scalar_select %p31, 0, %s30
      %s33 = sadd.s32 1, %s24
      %s34 = scalar_select %p31, %s33, %s24
      %p35 = scmp.ge.s32.totalorder %s34, 2
      %s36 = scalar_select %p35, 0, %s34
      %s37 = smul.u32 %s24, 4
      %s38 = sadd.s32 %s37, %s25
      %s39 = smul.u32 %s36, 4
      %s40 = sadd.s32 %s39, %s32
      %s41 = ssub.s32 %s38, %s40
      %p42 = scmp.eq.s32.totalorder %s41, 0
      %s44 = sadd.s32 %s43, 1
      %s45 = scalar_select %p42, %s43, %s44
      %p48 = pneg %p42
      %p49 = scmp.eq.s32.totalorder %s17, 7
      %p50 = por %p48, %p49
      %p51 = scmp.ne.s32.totalorder %s43, %s46
      %p52 = scmp.eq.s32.totalorder %s17, 0
      %p53 = por %p51, %p52
      %p54 = scmp.ne.s32.totalorder %s43, %s46
      %p55 = scmp.eq.s32.totalorder %s22, 7
      %p56 = por %p54, %p55
      %p57 = scmp.ne.s32.totalorder %s46, %s47
      %p58 = scmp.eq.s32.totalorder %s22, 0
      %p59 = por %p57, %p58
      %p60 = scmp.ne.s32.totalorder %s46, %s47
      %p61 = scmp.eq.s32.totalorder %s23, 7
      %p62 = por %p60, %p61
      %p64 = scmp.ne.s32.totalorder %s47, %s63
      %p65 = scmp.eq.s32.totalorder %s23, 0
      %p66 = por %p64, %p65
      %s67 = smul.u32 %s24, 4
      %s68 = sadd.s32 %s67, %s25
      %s69 = smul.u32 %s36, 4
      %s70 = sadd.s32 %s69, %s32
      %s71 = ssub.s32 %s68, %s70
      %p72 = scmp.eq.s32.totalorder %s71, 0
      %s74 = sadd.s32 %s73, 1
      %s75 = scalar_select %p72, %s73, %s74
      %p78 = pneg %p72
      %p79 = scmp.eq.s32.totalorder %s17, 7
      %p80 = por %p78, %p79
      %p81 = scmp.ne.s32.totalorder %s73, %s76
      %p82 = scmp.eq.s32.totalorder %s17, 0
      %p83 = por %p81, %p82
      %p84 = scmp.ne.s32.totalorder %s73, %s76
      %p85 = scmp.eq.s32.totalorder %s22, 7
      %p86 = por %p84, %p85
      %p87 = scmp.ne.s32.totalorder %s76, %s77
      %p88 = scmp.eq.s32.totalorder %s22, 0
      %p89 = por %p87, %p88
      %p90 = scmp.ne.s32.totalorder %s76, %s77
      %p91 = scmp.eq.s32.totalorder %s23, 7
      %p92 = por %p90, %p91
      %p94 = scmp.ne.s32.totalorder %s77, %s93
      %p95 = scmp.eq.s32.totalorder %s23, 0
      %p96 = por %p94, %p95
      %s97 = ssub.s32 %s24, %s36
      %p98 = scmp.eq.s32.totalorder %s97, 0
      %s100 = sadd.s32 %s99, 1
      %s101 = scalar_select %p98, %s99, %s100
      %p104 = pneg %p98
      %p105 = scmp.eq.s32.totalorder %s17, 7
      %p106 = por %p104, %p105
      %p107 = scmp.ne.s32.totalorder %s99, %s102
      %p108 = scmp.eq.s32.totalorder %s17, 0
      %p109 = por %p107, %p108
      %p110 = scmp.ne.s32.totalorder %s99, %s102
      %p111 = scmp.eq.s32.totalorder %s22, 7
      %p112 = por %p110, %p111
      %p113 = scmp.ne.s32.totalorder %s102, %s103
      %p114 = scmp.eq.s32.totalorder %s22, 0
      %p115 = por %p113, %p114
      %p116 = scmp.ne.s32.totalorder %s102, %s103
      %p117 = scmp.eq.s32.totalorder %s23, 7
      %p118 = por %p116, %p117
      %p120 = scmp.ne.s32.totalorder %s103, %s119
      %p121 = scmp.eq.s32.totalorder %s23, 0
      %p122 = por %p120, %p121
      %p123 = scmp.le.s32.totalorder 1, %s17
      %p124 = scmp.lt.s32.totalorder %s17, 9
      %p125 = pnand %p123, %p124
      %p126 = pneg %p125
      // Predicated region
      $region9: #{tpu_custom_call.1} parent=5 // pred_check
        _
      $region10: #{tpu_custom_call.1} parent=5 // pred_check_branch
        %128 = sbr.rel (%p125) target = $region12
      $region11: #{tpu_custom_call.1} parent=5 // pred_region
        %s129 = ssub.s32 %s17, 1
      $region12: #{tpu_custom_call.1} parent=5 // pred_fallthru
        _
      %p130 = scmp.lt.s32.totalorder %s17, 8
      // Predicated region
      $region13: #{tpu_custom_call.1} parent=5 // pred_check
        %p131 = pneg %p130
      $region14: #{tpu_custom_call.1} parent=5 // pred_check_branch
        %133 = sbr.rel (%p131) target = $region16
      $region15: #{tpu_custom_call.1} parent=5 // pred_region
        // Predicated region
        $region17: #{tpu_custom_call.1} parent=15 // pred_check
          %p134 = pneg %p53
        $region18: #{tpu_custom_call.1} parent=15 // pred_check_branch
          %136 = sbr.rel (%p134) target = $region20
        $region19: #{tpu_custom_call.1} parent=15 // pred_region
          #allocation10 [shape = 'u32[6]{0}', space=smem, size = 0x18, scoped, tag = 'DMA stride descriptor']
          %s137 = sand.u32 %s43, 1
          %s138 = scalar_lea.sflag [#allocation4], %s137
          %s139 = sand.u32 %s43, 1
          %s140 = smul.addr %s139, 1536
          %s141 = scalar_lea.vmem [#allocation3], %s140
          %s142 = smul.u32 %s24, 4
          %s143 = sadd.s32 %s142, %s25
          %s144 = smul.u32 24, %s143
          %146 = vsyncadd %s138, 0
          %s147 = smul.addr %s144, 4
          %s148 = smul.addr %s147, 8
          %s149 = scalar_lea.hbm %s0, %s148
          %s151 = sshll.u32 1, 14
          %s152 = sxor.u32 4294967295, %s151
          %s154 = sld [smem:[#allocation0]]
          %s155 = sadd.s32 2, %s154
          %s157 = sshll.u32 7, 26
          %s158 = sxor.u32 4294967295, %s157
          %s159 = sand.u32 0, %s158
          %s160 = sshll.u32 %s155, 26
          %s161 = sor.u32 %s159, %s160
          %s162 = sshll.u32 %s149, 4
          %s163 = int_to_ptr.hbm [resolvable:$true] %s162
          %s164 = sshll.u32 %s141, 4
          %s165 = int_to_ptr.vmem [resolvable:$true] %s164
          %171 = sst [smem:[#allocation10]] 98304
          %s172 = scalar_lea.smem [#allocation10], 1
          %173 = sst [smem:[%s172]] 12288
          %s174 = scalar_lea.smem [#allocation10], 2
          %175 = sst [smem:[%s174]] 24
          %s176 = scalar_lea.smem [#allocation10], 3
          %177 = sst [smem:[%s176]] 512
          %s178 = scalar_lea.smem [#allocation10], 4
          %179 = sst [smem:[%s178]] 512
          %s180 = scalar_lea.smem [#allocation10], 5
          %181 = sst [smem:[%s180]] 32
          %183 = dma.general %s163, 24576, %s165, %s138, [#allocation9], [#allocation10], %s161, 0
        $region20: #{tpu_custom_call.1} parent=15 // pred_fallthru
          _
        // Predicated region
        $region21: #{tpu_custom_call.1} parent=15 // pred_check
          %p184 = pneg %p83
        $region22: #{tpu_custom_call.1} parent=15 // pred_check_branch
          %186 = sbr.rel (%p184) target = $region24
        $region23: #{tpu_custom_call.1} parent=15 // pred_region
          #allocation12 [shape = 'u32[6]{0}', space=smem, size = 0x18, scoped, tag = 'DMA stride descriptor']
          %s187 = sand.u32 %s73, 1
          %s188 = scalar_lea.sflag [#allocation7], %s187
          %s189 = sand.u32 %s73, 1
          %s190 = smul.addr %s189, 1536
          %s191 = scalar_lea.vmem [#allocation6], %s190
          %s192 = smul.u32 %s24, 4
          %s193 = sadd.s32 %s192, %s25
          %s194 = smul.u32 24, %s193
          %196 = vsyncadd %s188, 0
          %s197 = smul.addr %s194, 4
          %s198 = smul.addr %s197, 8
          %s199 = scalar_lea.hbm %s1, %s198
          %s201 = sshll.u32 1, 14
          %s202 = sxor.u32 4294967295, %s201
          %s204 = sld [smem:[#allocation0]]
          %s205 = sadd.s32 2, %s204
          %s207 = sshll.u32 7, 26
          %s208 = sxor.u32 4294967295, %s207
          %s209 = sand.u32 0, %s208
          %s210 = sshll.u32 %s205, 26
          %s211 = sor.u32 %s209, %s210
          %s212 = sshll.u32 %s199, 4
          %s213 = int_to_ptr.hbm [resolvable:$true] %s212
          %s214 = sshll.u32 %s191, 4
          %s215 = int_to_ptr.vmem [resolvable:$true] %s214
          %221 = sst [smem:[#allocation12]] 98304
          %s222 = scalar_lea.smem [#allocation12], 1
          %223 = sst [smem:[%s222]] 12288
          %s224 = scalar_lea.smem [#allocation12], 2
          %225 = sst [smem:[%s224]] 24
          %s226 = scalar_lea.smem [#allocation12], 3
          %227 = sst [smem:[%s226]] 512
          %s228 = scalar_lea.smem [#allocation12], 4
          %229 = sst [smem:[%s228]] 512
          %s230 = scalar_lea.smem [#allocation12], 5
          %231 = sst [smem:[%s230]] 32
          %233 = dma.general %s213, 24576, %s215, %s188, [#allocation11], [#allocation12], %s211, 0
        $region24: #{tpu_custom_call.1} parent=15 // pred_fallthru
          _
      $region16: #{tpu_custom_call.1} parent=5 // pred_fallthru
        _
      %p234 = scmp.le.s32.totalorder 1, %s17
      %p235 = scmp.lt.s32.totalorder %s17, 9
      %p236 = pnand %p234, %p235
      %p237 = pneg %p236
      // Predicated region
      $region25: #{tpu_custom_call.1} parent=5 // pred_check
        _
      $region26: #{tpu_custom_call.1} parent=5 // pred_check_branch
        %239 = sbr.rel (%p236) target = $region28
      $region27: #{tpu_custom_call.1} parent=5 // pred_region
        %s240 = ssub.s32 %s17, 1
        %s241 = sand.u32 %s46, 1
        %s242 = scalar_lea.sflag [#allocation4], %s241
        %s243 = sand.u32 %s46, 1
        %s244 = smul.addr %s243, 1536
        %s245 = scalar_lea.vmem [#allocation3], %s244
        // Predicated region
        $region29: #{tpu_custom_call.1} parent=27 // pred_check
          %p246 = pneg %p59
        $region30: #{tpu_custom_call.1} parent=27 // pred_check_branch
          %248 = sbr.rel (%p246) target = $region32
        $region31: #{tpu_custom_call.1} parent=27 // pred_region
          %250 = dma.done %s242, 24576
        $region32: #{tpu_custom_call.1} parent=27 // pred_fallthru
          _
        %s251 = sand.u32 %s76, 1
        %s252 = scalar_lea.sflag [#allocation7], %s251
        %s253 = sand.u32 %s76, 1
        %s254 = smul.addr %s253, 1536
        %s255 = scalar_lea.vmem [#allocation6], %s254
        // Predicated region
        $region33: #{tpu_custom_call.1} parent=27 // pred_check
          %p256 = pneg %p89
        $region34: #{tpu_custom_call.1} parent=27 // pred_check_branch
          %258 = sbr.rel (%p256) target = $region36
        $region35: #{tpu_custom_call.1} parent=27 // pred_region
          %260 = dma.done %s252, 24576
        $region36: #{tpu_custom_call.1} parent=27 // pred_fallthru
          _
        %s261 = sand.u32 %s46, 1
        %s262 = scalar_lea.sflag [#allocation4], %s261
        %s263 = sand.u32 %s46, 1
        %s264 = smul.addr %s263, 1536
        %s265 = scalar_lea.vmem [#allocation3], %s264
        %p266 = pneg %p59
        %p267 = pneg %p56
        %s268 = sand.u32 %s76, 1
        %s269 = scalar_lea.sflag [#allocation7], %s268
        %s270 = sand.u32 %s76, 1
        %s271 = smul.addr %s270, 1536
        %s272 = scalar_lea.vmem [#allocation6], %s271
        %p273 = pneg %p89
        %p274 = pneg %p86
        %p275 = pneg %p115
        %p276 = pneg %p112
        %s277 = sand.u32 %s102, 1
        %s278 = scalar_lea.sflag [#allocation5], %s277
        %s279 = sand.u32 %s102, 1
        %s280 = smul.addr %s279, 2
        %s281 = scalar_lea.vmem [#allocation8], %s280
        %s282 = smul.u32 %s26, 4
        %s283 = sadd.s32 %s282, %s27
        %s284 = smul.u32 24, %s283
        %s285 = smul.u32 %s26, 4
        %s286 = sadd.s32 %s285, %s27
        %s287 = smul.u32 24, %s286
        %p288 = scmp.eq.s32.totalorder %s27, 0
        // Predicated region
        $region37: #{tpu_custom_call.1} parent=27 // pred_check
          %p289 = pneg %p288
        $region38: #{tpu_custom_call.1} parent=27 // pred_check_branch
          %291 = sbr.rel (%p289) target = $region40
        $region39: #{tpu_custom_call.1} parent=27 // pred_region
          %vm292 = vcmask 9216
          %293 = vst.msk [vmem:[#allocation2] sm:$0x3] %vm292, 0.0
        $region40: #{tpu_custom_call.1} parent=27 // pred_fallthru
          _
        %v294 = vld [vmem:[%s245] sm:$0xff]
        %v295 = vld [vmem:[%s245 + $0x8] sm:$0xff]
        %v296 = vld [vmem:[%s245 + $0x10] sm:$0xff]
        %v297 = vld [vmem:[%s245 + $0x18] sm:$0xff]
        %v298 = vld [vmem:[%s245 + $0x20] sm:$0xff]
        %v299 = vld [vmem:[%s245 + $0x28] sm:$0xff]
        %v300 = vld [vmem:[%s245 + $0x30] sm:$0xff]
        %v301 = vld [vmem:[%s245 + $0x38] sm:$0xff]
        %v302 = vld [vmem:[%s245 + $0x40] sm:$0xff]
        %v303 = vld [vmem:[%s245 + $0x48] sm:$0xff]
        %v304 = vld [vmem:[%s245 + $0x50] sm:$0xff]
        %v305 = vld [vmem:[%s245 + $0x58] sm:$0xff]
        %v306 = vld [vmem:[%s245 + $0x60] sm:$0xff]
        %v307 = vld [vmem:[%s245 + $0x68] sm:$0xff]
        %v308 = vld [vmem:[%s245 + $0x70] sm:$0xff]
        %v309 = vld [vmem:[%s245 + $0x78] sm:$0xff]
        %v310 = vld [vmem:[%s245 + $0x80] sm:$0xff]
        %v311 = vld [vmem:[%s245 + $0x88] sm:$0xff]
        %v312 = vld [vmem:[%s245 + $0x90] sm:$0xff]
        %v313 = vld [vmem:[%s245 + $0x98] sm:$0xff]
        %v314 = vld [vmem:[%s245 + $0xa0] sm:$0xff]
        %v315 = vld [vmem:[%s245 + $0xa8] sm:$0xff]
        %v316 = vld [vmem:[%s245 + $0xb0] sm:$0xff]
        %v317 = vld [vmem:[%s245 + $0xb8] sm:$0xff]
        %v318 = vld [vmem:[%s245 + $0xc0] sm:$0xff]
        %v319 = vld [vmem:[%s245 + $0xc8] sm:$0xff]
        %v320 = vld [vmem:[%s245 + $0xd0] sm:$0xff]
        %v321 = vld [vmem:[%s245 + $0xd8] sm:$0xff]
        %v322 = vld [vmem:[%s245 + $0xe0] sm:$0xff]
        %v323 = vld [vmem:[%s245 + $0xe8] sm:$0xff]
        %v324 = vld [vmem:[%s245 + $0xf0] sm:$0xff]
        %v325 = vld [vmem:[%s245 + $0xf8] sm:$0xff]
        %v326 = vld [vmem:[%s245 + $0x100] sm:$0xff]
        %v327 = vld [vmem:[%s245 + $0x108] sm:$0xff]
        %v328 = vld [vmem:[%s245 + $0x110] sm:$0xff]
        %v329 = vld [vmem:[%s245 + $0x118] sm:$0xff]
        %v330 = vld [vmem:[%s245 + $0x120] sm:$0xff]
        %v331 = vld [vmem:[%s245 + $0x128] sm:$0xff]
        %v332 = vld [vmem:[%s245 + $0x130] sm:$0xff]
        %v333 = vld [vmem:[%s245 + $0x138] sm:$0xff]
        %v334 = vld [vmem:[%s245 + $0x140] sm:$0xff]
        %v335 = vld [vmem:[%s245 + $0x148] sm:$0xff]
        %v336 = vld [vmem:[%s245 + $0x150] sm:$0xff]
        %v337 = vld [vmem:[%s245 + $0x158] sm:$0xff]
        %v338 = vld [vmem:[%s245 + $0x160] sm:$0xff]
        %v339 = vld [vmem:[%s245 + $0x168] sm:$0xff]
        %v340 = vld [vmem:[%s245 + $0x170] sm:$0xff]
        %v341 = vld [vmem:[%s245 + $0x178] sm:$0xff]
        %v342 = vld [vmem:[%s245 + $0x180] sm:$0xff]
        %v343 = vld [vmem:[%s245 + $0x188] sm:$0xff]
        %v344 = vld [vmem:[%s245 + $0x190] sm:$0xff]
        %v345 = vld [vmem:[%s245 + $0x198] sm:$0xff]
        %v346 = vld [vmem:[%s245 + $0x1a0] sm:$0xff]
        %v347 = vld [vmem:[%s245 + $0x1a8] sm:$0xff]
        %v348 = vld [vmem:[%s245 + $0x1b0] sm:$0xff]
        %v349 = vld [vmem:[%s245 + $0x1b8] sm:$0xff]
        %v350 = vld [vmem:[%s245 + $0x1c0] sm:$0xff]
        %v351 = vld [vmem:[%s245 + $0x1c8] sm:$0xff]
        %v352 = vld [vmem:[%s245 + $0x1d0] sm:$0xff]
        %v353 = vld [vmem:[%s245 + $0x1d8] sm:$0xff]
        %v354 = vld [vmem:[%s245 + $0x1e0] sm:$0xff]
        %v355 = vld [vmem:[%s245 + $0x1e8] sm:$0xff]
        %v356 = vld [vmem:[%s245 + $0x1f0] sm:$0xff]
        %v357 = vld [vmem:[%s245 + $0x1f8] sm:$0xff]
        %v358 = vld [vmem:[%s245 + $0x200] sm:$0xff]
        %v359 = vld [vmem:[%s245 + $0x208] sm:$0xff]
        %v360 = vld [vmem:[%s245 + $0x210] sm:$0xff]
        %v361 = vld [vmem:[%s245 + $0x218] sm:$0xff]
        %v362 = vld [vmem:[%s245 + $0x220] sm:$0xff]
        %v363 = vld [vmem:[%s245 + $0x228] sm:$0xff]
        %v364 = vld [vmem:[%s245 + $0x230] sm:$0xff]
        %v365 = vld [vmem:[%s245 + $0x238] sm:$0xff]
        %v366 = vld [vmem:[%s245 + $0x240] sm:$0xff]
        %v367 = vld [vmem:[%s245 + $0x248] sm:$0xff]
        %v368 = vld [vmem:[%s245 + $0x250] sm:$0xff]
        %v369 = vld [vmem:[%s245 + $0x258] sm:$0xff]
        %v370 = vld [vmem:[%s245 + $0x260] sm:$0xff]
        %v371 = vld [vmem:[%s245 + $0x268] sm:$0xff]
        %v372 = vld [vmem:[%s245 + $0x270] sm:$0xff]
        %v373 = vld [vmem:[%s245 + $0x278] sm:$0xff]
        %v374 = vld [vmem:[%s245 + $0x280] sm:$0xff]
        %v375 = vld [vmem:[%s245 + $0x288] sm:$0xff]
        %v376 = vld [vmem:[%s245 + $0x290] sm:$0xff]
        %v377 = vld [vmem:[%s245 + $0x298] sm:$0xff]
        %v378 = vld [vmem:[%s245 + $0x2a0] sm:$0xff]
        %v379 = vld [vmem:[%s245 + $0x2a8] sm:$0xff]
        %v380 = vld [vmem:[%s245 + $0x2b0] sm:$0xff]
        %v381 = vld [vmem:[%s245 + $0x2b8] sm:$0xff]
        %v382 = vld [vmem:[%s245 + $0x2c0] sm:$0xff]
        %v383 = vld [vmem:[%s245 + $0x2c8] sm:$0xff]
        %v384 = vld [vmem:[%s245 + $0x2d0] sm:$0xff]
        %v385 = vld [vmem:[%s245 + $0x2d8] sm:$0xff]
        %v386 = vld [vmem:[%s245 + $0x2e0] sm:$0xff]
        %v387 = vld [vmem:[%s245 + $0x2e8] sm:$0xff]
        %v388 = vld [vmem:[%s245 + $0x2f0] sm:$0xff]
        %v389 = vld [vmem:[%s245 + $0x2f8] sm:$0xff]
        %v390 = vld [vmem:[%s245 + $0x300] sm:$0xff]
        %v391 = vld [vmem:[%s245 + $0x308] sm:$0xff]
        %v392 = vld [vmem:[%s245 + $0x310] sm:$0xff]
        %v393 = vld [vmem:[%s245 + $0x318] sm:$0xff]
        %v394 = vld [vmem:[%s245 + $0x320] sm:$0xff]
        %v395 = vld [vmem:[%s245 + $0x328] sm:$0xff]
        %v396 = vld [vmem:[%s245 + $0x330] sm:$0xff]
        %v397 = vld [vmem:[%s245 + $0x338] sm:$0xff]
        %v398 = vld [vmem:[%s245 + $0x340] sm:$0xff]
        %v399 = vld [vmem:[%s245 + $0x348] sm:$0xff]
        %v400 = vld [vmem:[%s245 + $0x350] sm:$0xff]
        %v401 = vld [vmem:[%s245 + $0x358] sm:$0xff]
        %v402 = vld [vmem:[%s245 + $0x360] sm:$0xff]
        %v403 = vld [vmem:[%s245 + $0x368] sm:$0xff]
        %v404 = vld [vmem:[%s245 + $0x370] sm:$0xff]
        %v405 = vld [vmem:[%s245 + $0x378] sm:$0xff]
        %v406 = vld [vmem:[%s245 + $0x380] sm:$0xff]
        %v407 = vld [vmem:[%s245 + $0x388] sm:$0xff]
        %v408 = vld [vmem:[%s245 + $0x390] sm:$0xff]
        %v409 = vld [vmem:[%s245 + $0x398] sm:$0xff]
        %v410 = vld [vmem:[%s245 + $0x3a0] sm:$0xff]
        %v411 = vld [vmem:[%s245 + $0x3a8] sm:$0xff]
        %v412 = vld [vmem:[%s245 + $0x3b0] sm:$0xff]
        %v413 = vld [vmem:[%s245 + $0x3b8] sm:$0xff]
        %v414 = vld [vmem:[%s245 + $0x3c0] sm:$0xff]
        %v415 = vld [vmem:[%s245 + $0x3c8] sm:$0xff]
        %v416 = vld [vmem:[%s245 + $0x3d0] sm:$0xff]
        %v417 = vld [vmem:[%s245 + $0x3d8] sm:$0xff]
        %v418 = vld [vmem:[%s245 + $0x3e0] sm:$0xff]
        %v419 = vld [vmem:[%s245 + $0x3e8] sm:$0xff]
        %v420 = vld [vmem:[%s245 + $0x3f0] sm:$0xff]
        %v421 = vld [vmem:[%s245 + $0x3f8] sm:$0xff]
        %v422 = vld [vmem:[%s245 + $0x400] sm:$0xff]
        %v423 = vld [vmem:[%s245 + $0x408] sm:$0xff]
        %v424 = vld [vmem:[%s245 + $0x410] sm:$0xff]
        %v425 = vld [vmem:[%s245 + $0x418] sm:$0xff]
        %v426 = vld [vmem:[%s245 + $0x420] sm:$0xff]
        %v427 = vld [vmem:[%s245 + $0x428] sm:$0xff]
        %v428 = vld [vmem:[%s245 + $0x430] sm:$0xff]
        %v429 = vld [vmem:[%s245 + $0x438] sm:$0xff]
        %v430 = vld [vmem:[%s245 + $0x440] sm:$0xff]
        %v431 = vld [vmem:[%s245 + $0x448] sm:$0xff]
        %v432 = vld [vmem:[%s245 + $0x450] sm:$0xff]
        %v433 = vld [vmem:[%s245 + $0x458] sm:$0xff]
        %v434 = vld [vmem:[%s245 + $0x460] sm:$0xff]
        %v435 = vld [vmem:[%s245 + $0x468] sm:$0xff]
        %v436 = vld [vmem:[%s245 + $0x470] sm:$0xff]
        %v437 = vld [vmem:[%s245 + $0x478] sm:$0xff]
        %v438 = vld [vmem:[%s245 + $0x480] sm:$0xff]
        %v439 = vld [vmem:[%s245 + $0x488] sm:$0xff]
        %v440 = vld [vmem:[%s245 + $0x490] sm:$0xff]
        %v441 = vld [vmem:[%s245 + $0x498] sm:$0xff]
        %v442 = vld [vmem:[%s245 + $0x4a0] sm:$0xff]
        %v443 = vld [vmem:[%s245 + $0x4a8] sm:$0xff]
        %v444 = vld [vmem:[%s245 + $0x4b0] sm:$0xff]
        %v445 = vld [vmem:[%s245 + $0x4b8] sm:$0xff]
        %v446 = vld [vmem:[%s245 + $0x4c0] sm:$0xff]
        %v447 = vld [vmem:[%s245 + $0x4c8] sm:$0xff]
        %v448 = vld [vmem:[%s245 + $0x4d0] sm:$0xff]
        %v449 = vld [vmem:[%s245 + $0x4d8] sm:$0xff]
        %v450 = vld [vmem:[%s245 + $0x4e0] sm:$0xff]
        %v451 = vld [vmem:[%s245 + $0x4e8] sm:$0xff]
        %v452 = vld [vmem:[%s245 + $0x4f0] sm:$0xff]
        %v453 = vld [vmem:[%s245 + $0x4f8] sm:$0xff]
        %v454 = vld [vmem:[%s245 + $0x500] sm:$0xff]
        %v455 = vld [vmem:[%s245 + $0x508] sm:$0xff]
        %v456 = vld [vmem:[%s245 + $0x510] sm:$0xff]
        %v457 = vld [vmem:[%s245 + $0x518] sm:$0xff]
        %v458 = vld [vmem:[%s245 + $0x520] sm:$0xff]
        %v459 = vld [vmem:[%s245 + $0x528] sm:$0xff]
        %v460 = vld [vmem:[%s245 + $0x530] sm:$0xff]
        %v461 = vld [vmem:[%s245 + $0x538] sm:$0xff]
        %v462 = vld [vmem:[%s245 + $0x540] sm:$0xff]
        %v463 = vld [vmem:[%s245 + $0x548] sm:$0xff]
        %v464 = vld [vmem:[%s245 + $0x550] sm:$0xff]
        %v465 = vld [vmem:[%s245 + $0x558] sm:$0xff]
        %v466 = vld [vmem:[%s245 + $0x560] sm:$0xff]
        %v467 = vld [vmem:[%s245 + $0x568] sm:$0xff]
        %v468 = vld [vmem:[%s245 + $0x570] sm:$0xff]
        %v469 = vld [vmem:[%s245 + $0x578] sm:$0xff]
        %v470 = vld [vmem:[%s245 + $0x580] sm:$0xff]
        %v471 = vld [vmem:[%s245 + $0x588] sm:$0xff]
        %v472 = vld [vmem:[%s245 + $0x590] sm:$0xff]
        %v473 = vld [vmem:[%s245 + $0x598] sm:$0xff]
        %v474 = vld [vmem:[%s245 + $0x5a0] sm:$0xff]
        %v475 = vld [vmem:[%s245 + $0x5a8] sm:$0xff]
        %v476 = vld [vmem:[%s245 + $0x5b0] sm:$0xff]
        %v477 = vld [vmem:[%s245 + $0x5b8] sm:$0xff]
        %v478 = vld [vmem:[%s245 + $0x5c0] sm:$0xff]
        %v479 = vld [vmem:[%s245 + $0x5c8] sm:$0xff]
        %v480 = vld [vmem:[%s245 + $0x5d0] sm:$0xff]
        %v481 = vld [vmem:[%s245 + $0x5d8] sm:$0xff]
        %v482 = vld [vmem:[%s245 + $0x5e0] sm:$0xff]
        %v483 = vld [vmem:[%s245 + $0x5e8] sm:$0xff]
        %v484 = vld [vmem:[%s245 + $0x5f0] sm:$0xff]
        %v485 = vld [vmem:[%s245 + $0x5f8] sm:$0xff]
        %v486 = vld [vmem:[%s255] sm:$0xff]
        %v487 = vld [vmem:[%s255 + $0x8] sm:$0xff]
        %v488 = vld [vmem:[%s255 + $0x10] sm:$0xff]
        %v489 = vld [vmem:[%s255 + $0x18] sm:$0xff]
        %v490 = vld [vmem:[%s255 + $0x20] sm:$0xff]
        %v491 = vld [vmem:[%s255 + $0x28] sm:$0xff]
        %v492 = vld [vmem:[%s255 + $0x30] sm:$0xff]
        %v493 = vld [vmem:[%s255 + $0x38] sm:$0xff]
        %v494 = vld [vmem:[%s255 + $0x40] sm:$0xff]
        %v495 = vld [vmem:[%s255 + $0x48] sm:$0xff]
        %v496 = vld [vmem:[%s255 + $0x50] sm:$0xff]
        %v497 = vld [vmem:[%s255 + $0x58] sm:$0xff]
        %v498 = vld [vmem:[%s255 + $0x60] sm:$0xff]
        %v499 = vld [vmem:[%s255 + $0x68] sm:$0xff]
        %v500 = vld [vmem:[%s255 + $0x70] sm:$0xff]
        %v501 = vld [vmem:[%s255 + $0x78] sm:$0xff]
        %v502 = vld [vmem:[%s255 + $0x80] sm:$0xff]
        %v503 = vld [vmem:[%s255 + $0x88] sm:$0xff]
        %v504 = vld [vmem:[%s255 + $0x90] sm:$0xff]
        %v505 = vld [vmem:[%s255 + $0x98] sm:$0xff]
        %v506 = vld [vmem:[%s255 + $0xa0] sm:$0xff]
        %v507 = vld [vmem:[%s255 + $0xa8] sm:$0xff]
        %v508 = vld [vmem:[%s255 + $0xb0] sm:$0xff]
        %v509 = vld [vmem:[%s255 + $0xb8] sm:$0xff]
        %v510 = vld [vmem:[%s255 + $0xc0] sm:$0xff]
        %v511 = vld [vmem:[%s255 + $0xc8] sm:$0xff]
        %v512 = vld [vmem:[%s255 + $0xd0] sm:$0xff]
        %v513 = vld [vmem:[%s255 + $0xd8] sm:$0xff]
        %v514 = vld [vmem:[%s255 + $0xe0] sm:$0xff]
        %v515 = vld [vmem:[%s255 + $0xe8] sm:$0xff]
        %v516 = vld [vmem:[%s255 + $0xf0] sm:$0xff]
        %v517 = vld [vmem:[%s255 + $0xf8] sm:$0xff]
        %v518 = vld [vmem:[%s255 + $0x100] sm:$0xff]
        %v519 = vld [vmem:[%s255 + $0x108] sm:$0xff]
        %v520 = vld [vmem:[%s255 + $0x110] sm:$0xff]
        %v521 = vld [vmem:[%s255 + $0x118] sm:$0xff]
        %v522 = vld [vmem:[%s255 + $0x120] sm:$0xff]
        %v523 = vld [vmem:[%s255 + $0x128] sm:$0xff]
        %v524 = vld [vmem:[%s255 + $0x130] sm:$0xff]
        %v525 = vld [vmem:[%s255 + $0x138] sm:$0xff]
        %v526 = vld [vmem:[%s255 + $0x140] sm:$0xff]
        %v527 = vld [vmem:[%s255 + $0x148] sm:$0xff]
        %v528 = vld [vmem:[%s255 + $0x150] sm:$0xff]
        %v529 = vld [vmem:[%s255 + $0x158] sm:$0xff]
        %v530 = vld [vmem:[%s255 + $0x160] sm:$0xff]
        %v531 = vld [vmem:[%s255 + $0x168] sm:$0xff]
        %v532 = vld [vmem:[%s255 + $0x170] sm:$0xff]
        %v533 = vld [vmem:[%s255 + $0x178] sm:$0xff]
        %v534 = vld [vmem:[%s255 + $0x180] sm:$0xff]
        %v535 = vld [vmem:[%s255 + $0x188] sm:$0xff]
        %v536 = vld [vmem:[%s255 + $0x190] sm:$0xff]
        %v537 = vld [vmem:[%s255 + $0x198] sm:$0xff]
        %v538 = vld [vmem:[%s255 + $0x1a0] sm:$0xff]
        %v539 = vld [vmem:[%s255 + $0x1a8] sm:$0xff]
        %v540 = vld [vmem:[%s255 + $0x1b0] sm:$0xff]
        %v541 = vld [vmem:[%s255 + $0x1b8] sm:$0xff]
        %v542 = vld [vmem:[%s255 + $0x1c0] sm:$0xff]
        %v543 = vld [vmem:[%s255 + $0x1c8] sm:$0xff]
        %v544 = vld [vmem:[%s255 + $0x1d0] sm:$0xff]
        %v545 = vld [vmem:[%s255 + $0x1d8] sm:$0xff]
        %v546 = vld [vmem:[%s255 + $0x1e0] sm:$0xff]
        %v547 = vld [vmem:[%s255 + $0x1e8] sm:$0xff]
        %v548 = vld [vmem:[%s255 + $0x1f0] sm:$0xff]
        %v549 = vld [vmem:[%s255 + $0x1f8] sm:$0xff]
        %v550 = vld [vmem:[%s255 + $0x200] sm:$0xff]
        %v551 = vld [vmem:[%s255 + $0x208] sm:$0xff]
        %v552 = vld [vmem:[%s255 + $0x210] sm:$0xff]
        %v553 = vld [vmem:[%s255 + $0x218] sm:$0xff]
        %v554 = vld [vmem:[%s255 + $0x220] sm:$0xff]
        %v555 = vld [vmem:[%s255 + $0x228] sm:$0xff]
        %v556 = vld [vmem:[%s255 + $0x230] sm:$0xff]
        %v557 = vld [vmem:[%s255 + $0x238] sm:$0xff]
        %v558 = vld [vmem:[%s255 + $0x240] sm:$0xff]
        %v559 = vld [vmem:[%s255 + $0x248] sm:$0xff]
        %v560 = vld [vmem:[%s255 + $0x250] sm:$0xff]
        %v561 = vld [vmem:[%s255 + $0x258] sm:$0xff]
        %v562 = vld [vmem:[%s255 + $0x260] sm:$0xff]
        %v563 = vld [vmem:[%s255 + $0x268] sm:$0xff]
        %v564 = vld [vmem:[%s255 + $0x270] sm:$0xff]
        %v565 = vld [vmem:[%s255 + $0x278] sm:$0xff]
        %v566 = vld [vmem:[%s255 + $0x280] sm:$0xff]
        %v567 = vld [vmem:[%s255 + $0x288] sm:$0xff]
        %v568 = vld [vmem:[%s255 + $0x290] sm:$0xff]
        %v569 = vld [vmem:[%s255 + $0x298] sm:$0xff]
        %v570 = vld [vmem:[%s255 + $0x2a0] sm:$0xff]
        %v571 = vld [vmem:[%s255 + $0x2a8] sm:$0xff]
        %v572 = vld [vmem:[%s255 + $0x2b0] sm:$0xff]
        %v573 = vld [vmem:[%s255 + $0x2b8] sm:$0xff]
        %v574 = vld [vmem:[%s255 + $0x2c0] sm:$0xff]
        %v575 = vld [vmem:[%s255 + $0x2c8] sm:$0xff]
        %v576 = vld [vmem:[%s255 + $0x2d0] sm:$0xff]
        %v577 = vld [vmem:[%s255 + $0x2d8] sm:$0xff]
        %v578 = vld [vmem:[%s255 + $0x2e0] sm:$0xff]
        %v579 = vld [vmem:[%s255 + $0x2e8] sm:$0xff]
        %v580 = vld [vmem:[%s255 + $0x2f0] sm:$0xff]
        %v581 = vld [vmem:[%s255 + $0x2f8] sm:$0xff]
        %v582 = vld [vmem:[%s255 + $0x300] sm:$0xff]
        %v583 = vld [vmem:[%s255 + $0x308] sm:$0xff]
        %v584 = vld [vmem:[%s255 + $0x310] sm:$0xff]
        %v585 = vld [vmem:[%s255 + $0x318] sm:$0xff]
        %v586 = vld [vmem:[%s255 + $0x320] sm:$0xff]
        %v587 = vld [vmem:[%s255 + $0x328] sm:$0xff]
        %v588 = vld [vmem:[%s255 + $0x330] sm:$0xff]
        %v589 = vld [vmem:[%s255 + $0x338] sm:$0xff]
        %v590 = vld [vmem:[%s255 + $0x340] sm:$0xff]
        %v591 = vld [vmem:[%s255 + $0x348] sm:$0xff]
        %v592 = vld [vmem:[%s255 + $0x350] sm:$0xff]
        %v593 = vld [vmem:[%s255 + $0x358] sm:$0xff]
        %v594 = vld [vmem:[%s255 + $0x360] sm:$0xff]
        %v595 = vld [vmem:[%s255 + $0x368] sm:$0xff]
        %v596 = vld [vmem:[%s255 + $0x370] sm:$0xff]
        %v597 = vld [vmem:[%s255 + $0x378] sm:$0xff]
        %v598 = vld [vmem:[%s255 + $0x380] sm:$0xff]
        %v599 = vld [vmem:[%s255 + $0x388] sm:$0xff]
        %v600 = vld [vmem:[%s255 + $0x390] sm:$0xff]
        %v601 = vld [vmem:[%s255 + $0x398] sm:$0xff]
        %v602 = vld [vmem:[%s255 + $0x3a0] sm:$0xff]
        %v603 = vld [vmem:[%s255 + $0x3a8] sm:$0xff]
        %v604 = vld [vmem:[%s255 + $0x3b0] sm:$0xff]
        %v605 = vld [vmem:[%s255 + $0x3b8] sm:$0xff]
        %v606 = vld [vmem:[%s255 + $0x3c0] sm:$0xff]
        %v607 = vld [vmem:[%s255 + $0x3c8] sm:$0xff]
        %v608 = vld [vmem:[%s255 + $0x3d0] sm:$0xff]
        %v609 = vld [vmem:[%s255 + $0x3d8] sm:$0xff]
        %v610 = vld [vmem:[%s255 + $0x3e0] sm:$0xff]
        %v611 = vld [vmem:[%s255 + $0x3e8] sm:$0xff]
        %v612 = vld [vmem:[%s255 + $0x3f0] sm:$0xff]
        %v613 = vld [vmem:[%s255 + $0x3f8] sm:$0xff]
        %v614 = vld [vmem:[%s255 + $0x400] sm:$0xff]
        %v615 = vld [vmem:[%s255 + $0x408] sm:$0xff]
        %v616 = vld [vmem:[%s255 + $0x410] sm:$0xff]
        %v617 = vld [vmem:[%s255 + $0x418] sm:$0xff]
        %v618 = vld [vmem:[%s255 + $0x420] sm:$0xff]
        %v619 = vld [vmem:[%s255 + $0x428] sm:$0xff]
        %v620 = vld [vmem:[%s255 + $0x430] sm:$0xff]
        %v621 = vld [vmem:[%s255 + $0x438] sm:$0xff]
        %v622 = vld [vmem:[%s255 + $0x440] sm:$0xff]
        %v623 = vld [vmem:[%s255 + $0x448] sm:$0xff]
        %v624 = vld [vmem:[%s255 + $0x450] sm:$0xff]
        %v625 = vld [vmem:[%s255 + $0x458] sm:$0xff]
        %v626 = vld [vmem:[%s255 + $0x460] sm:$0xff]
        %v627 = vld [vmem:[%s255 + $0x468] sm:$0xff]
        %v628 = vld [vmem:[%s255 + $0x470] sm:$0xff]
        %v629 = vld [vmem:[%s255 + $0x478] sm:$0xff]
        %v630 = vld [vmem:[%s255 + $0x480] sm:$0xff]
        %v631 = vld [vmem:[%s255 + $0x488] sm:$0xff]
        %v632 = vld [vmem:[%s255 + $0x490] sm:$0xff]
        %v633 = vld [vmem:[%s255 + $0x498] sm:$0xff]
        %v634 = vld [vmem:[%s255 + $0x4a0] sm:$0xff]
        %v635 = vld [vmem:[%s255 + $0x4a8] sm:$0xff]
        %v636 = vld [vmem:[%s255 + $0x4b0] sm:$0xff]
        %v637 = vld [vmem:[%s255 + $0x4b8] sm:$0xff]
        %v638 = vld [vmem:[%s255 + $0x4c0] sm:$0xff]
        %v639 = vld [vmem:[%s255 + $0x4c8] sm:$0xff]
        %v640 = vld [vmem:[%s255 + $0x4d0] sm:$0xff]
        %v641 = vld [vmem:[%s255 + $0x4d8] sm:$0xff]
        %v642 = vld [vmem:[%s255 + $0x4e0] sm:$0xff]
        %v643 = vld [vmem:[%s255 + $0x4e8] sm:$0xff]
        %v644 = vld [vmem:[%s255 + $0x4f0] sm:$0xff]
        %v645 = vld [vmem:[%s255 + $0x4f8] sm:$0xff]
        %v646 = vld [vmem:[%s255 + $0x500] sm:$0xff]
        %v647 = vld [vmem:[%s255 + $0x508] sm:$0xff]
        %v648 = vld [vmem:[%s255 + $0x510] sm:$0xff]
        %v649 = vld [vmem:[%s255 + $0x518] sm:$0xff]
        %v650 = vld [vmem:[%s255 + $0x520] sm:$0xff]
        %v651 = vld [vmem:[%s255 + $0x528] sm:$0xff]
        %v652 = vld [vmem:[%s255 + $0x530] sm:$0xff]
        %v653 = vld [vmem:[%s255 + $0x538] sm:$0xff]
        %v654 = vld [vmem:[%s255 + $0x540] sm:$0xff]
        %v655 = vld [vmem:[%s255 + $0x548] sm:$0xff]
        %v656 = vld [vmem:[%s255 + $0x550] sm:$0xff]
        %v657 = vld [vmem:[%s255 + $0x558] sm:$0xff]
        %v658 = vld [vmem:[%s255 + $0x560] sm:$0xff]
        %v659 = vld [vmem:[%s255 + $0x568] sm:$0xff]
        %v660 = vld [vmem:[%s255 + $0x570] sm:$0xff]
        %v661 = vld [vmem:[%s255 + $0x578] sm:$0xff]
        %v662 = vld [vmem:[%s255 + $0x580] sm:$0xff]
        %v663 = vld [vmem:[%s255 + $0x588] sm:$0xff]
        %v664 = vld [vmem:[%s255 + $0x590] sm:$0xff]
        %v665 = vld [vmem:[%s255 + $0x598] sm:$0xff]
        %v666 = vld [vmem:[%s255 + $0x5a0] sm:$0xff]
        %v667 = vld [vmem:[%s255 + $0x5a8] sm:$0xff]
        %v668 = vld [vmem:[%s255 + $0x5b0] sm:$0xff]
        %v669 = vld [vmem:[%s255 + $0x5b8] sm:$0xff]
        %v670 = vld [vmem:[%s255 + $0x5c0] sm:$0xff]
        %v671 = vld [vmem:[%s255 + $0x5c8] sm:$0xff]
        %v672 = vld [vmem:[%s255 + $0x5d0] sm:$0xff]
        %v673 = vld [vmem:[%s255 + $0x5d8] sm:$0xff]
        %v674 = vld [vmem:[%s255 + $0x5e0] sm:$0xff]
        %v675 = vld [vmem:[%s255 + $0x5e8] sm:$0xff]
        %v676 = vld [vmem:[%s255 + $0x5f0] sm:$0xff]
        %v677 = vld [vmem:[%s255 + $0x5f8] sm:$0xff]
        %v678 = vmul.f32 %v294, %v486
        %v679 = vmul.f32 %v295, %v487
        %v680 = vmul.f32 %v296, %v488
        %v681 = vmul.f32 %v297, %v489
        %v682 = vmul.f32 %v298, %v490
        %v683 = vmul.f32 %v299, %v491
        %v684 = vmul.f32 %v300, %v492
        %v685 = vmul.f32 %v301, %v493
        %v686 = vmul.f32 %v302, %v494
        %v687 = vmul.f32 %v303, %v495
        %v688 = vmul.f32 %v304, %v496
        %v689 = vmul.f32 %v305, %v497
        %v690 = vmul.f32 %v306, %v498
        %v691 = vmul.f32 %v307, %v499
        %v692 = vmul.f32 %v308, %v500
        %v693 = vmul.f32 %v309, %v501
        %v694 = vmul.f32 %v310, %v502
        %v695 = vmul.f32 %v311, %v503
        %v696 = vmul.f32 %v312, %v504
        %v697 = vmul.f32 %v313, %v505
        %v698 = vmul.f32 %v314, %v506
        %v699 = vmul.f32 %v315, %v507
        %v700 = vmul.f32 %v316, %v508
        %v701 = vmul.f32 %v317, %v509
        %v702 = vmul.f32 %v318, %v510
        %v703 = vmul.f32 %v319, %v511
        %v704 = vmul.f32 %v320, %v512
        %v705 = vmul.f32 %v321, %v513
        %v706 = vmul.f32 %v322, %v514
        %v707 = vmul.f32 %v323, %v515
        %v708 = vmul.f32 %v324, %v516
        %v709 = vmul.f32 %v325, %v517
        %v710 = vmul.f32 %v326, %v518
        %v711 = vmul.f32 %v327, %v519
        %v712 = vmul.f32 %v328, %v520
        %v713 = vmul.f32 %v329, %v521
        %v714 = vmul.f32 %v330, %v522
        %v715 = vmul.f32 %v331, %v523
        %v716 = vmul.f32 %v332, %v524
        %v717 = vmul.f32 %v333, %v525
        %v718 = vmul.f32 %v334, %v526
        %v719 = vmul.f32 %v335, %v527
        %v720 = vmul.f32 %v336, %v528
        %v721 = vmul.f32 %v337, %v529
        %v722 = vmul.f32 %v338, %v530
        %v723 = vmul.f32 %v339, %v531
        %v724 = vmul.f32 %v340, %v532
        %v725 = vmul.f32 %v341, %v533
        %v726 = vmul.f32 %v342, %v534
        %v727 = vmul.f32 %v343, %v535
        %v728 = vmul.f32 %v344, %v536
        %v729 = vmul.f32 %v345, %v537
        %v730 = vmul.f32 %v346, %v538
        %v731 = vmul.f32 %v347, %v539
        %v732 = vmul.f32 %v348, %v540
        %v733 = vmul.f32 %v349, %v541
        %v734 = vmul.f32 %v350, %v542
        %v735 = vmul.f32 %v351, %v543
        %v736 = vmul.f32 %v352, %v544
        %v737 = vmul.f32 %v353, %v545
        %v738 = vmul.f32 %v354, %v546
        %v739 = vmul.f32 %v355, %v547
        %v740 = vmul.f32 %v356, %v548
        %v741 = vmul.f32 %v357, %v549
        %v742 = vmul.f32 %v358, %v550
        %v743 = vmul.f32 %v359, %v551
        %v744 = vmul.f32 %v360, %v552
        %v745 = vmul.f32 %v361, %v553
        %v746 = vmul.f32 %v362, %v554
        %v747 = vmul.f32 %v363, %v555
        %v748 = vmul.f32 %v364, %v556
        %v749 = vmul.f32 %v365, %v557
        %v750 = vmul.f32 %v366, %v558
        %v751 = vmul.f32 %v367, %v559
        %v752 = vmul.f32 %v368, %v560
        %v753 = vmul.f32 %v369, %v561
        %v754 = vmul.f32 %v370, %v562
        %v755 = vmul.f32 %v371, %v563
        %v756 = vmul.f32 %v372, %v564
        %v757 = vmul.f32 %v373, %v565
        %v758 = vmul.f32 %v374, %v566
        %v759 = vmul.f32 %v375, %v567
        %v760 = vmul.f32 %v376, %v568
        %v761 = vmul.f32 %v377, %v569
        %v762 = vmul.f32 %v378, %v570
        %v763 = vmul.f32 %v379, %v571
        %v764 = vmul.f32 %v380, %v572
        %v765 = vmul.f32 %v381, %v573
        %v766 = vmul.f32 %v382, %v574
        %v767 = vmul.f32 %v383, %v575
        %v768 = vmul.f32 %v384, %v576
        %v769 = vmul.f32 %v385, %v577
        %v770 = vmul.f32 %v386, %v578
        %v771 = vmul.f32 %v387, %v579
        %v772 = vmul.f32 %v388, %v580
        %v773 = vmul.f32 %v389, %v581
        %v774 = vmul.f32 %v390, %v486
        %v775 = vmul.f32 %v391, %v487
        %v776 = vmul.f32 %v392, %v488
        %v777 = vmul.f32 %v393, %v489
        %v778 = vmul.f32 %v394, %v490
        %v779 = vmul.f32 %v395, %v491
        %v780 = vmul.f32 %v396, %v492
        %v781 = vmul.f32 %v397, %v493
        %v782 = vmul.f32 %v398, %v494
        %v783 = vmul.f32 %v399, %v495
        %v784 = vmul.f32 %v400, %v496
        %v785 = vmul.f32 %v401, %v497
        %v786 = vmul.f32 %v402, %v498
        %v787 = vmul.f32 %v403, %v499
        %v788 = vmul.f32 %v404, %v500
        %v789 = vmul.f32 %v405, %v501
        %v790 = vmul.f32 %v406, %v502
        %v791 = vmul.f32 %v407, %v503
        %v792 = vmul.f32 %v408, %v504
        %v793 = vmul.f32 %v409, %v505
        %v794 = vmul.f32 %v410, %v506
        %v795 = vmul.f32 %v411, %v507
        %v796 = vmul.f32 %v412, %v508
        %v797 = vmul.f32 %v413, %v509
        %v798 = vmul.f32 %v414, %v510
        %v799 = vmul.f32 %v415, %v511
        %v800 = vmul.f32 %v416, %v512
        %v801 = vmul.f32 %v417, %v513
        %v802 = vmul.f32 %v418, %v514
        %v803 = vmul.f32 %v419, %v515
        %v804 = vmul.f32 %v420, %v516
        %v805 = vmul.f32 %v421, %v517
        %v806 = vmul.f32 %v422, %v518
        %v807 = vmul.f32 %v423, %v519
        %v808 = vmul.f32 %v424, %v520
        %v809 = vmul.f32 %v425, %v521
        %v810 = vmul.f32 %v426, %v522
        %v811 = vmul.f32 %v427, %v523
        %v812 = vmul.f32 %v428, %v524
        %v813 = vmul.f32 %v429, %v525
        %v814 = vmul.f32 %v430, %v526
        %v815 = vmul.f32 %v431, %v527
        %v816 = vmul.f32 %v432, %v528
        %v817 = vmul.f32 %v433, %v529
        %v818 = vmul.f32 %v434, %v530
        %v819 = vmul.f32 %v435, %v531
        %v820 = vmul.f32 %v436, %v532
        %v821 = vmul.f32 %v437, %v533
        %v822 = vmul.f32 %v438, %v534
        %v823 = vmul.f32 %v439, %v535
        %v824 = vmul.f32 %v440, %v536
        %v825 = vmul.f32 %v441, %v537
        %v826 = vmul.f32 %v442, %v538
        %v827 = vmul.f32 %v443, %v539
        %v828 = vmul.f32 %v444, %v540
        %v829 = vmul.f32 %v445, %v541
        %v830 = vmul.f32 %v446, %v542
        %v831 = vmul.f32 %v447, %v543
        %v832 = vmul.f32 %v448, %v544
        %v833 = vmul.f32 %v449, %v545
        %v834 = vmul.f32 %v450, %v546
        %v835 = vmul.f32 %v451, %v547
        %v836 = vmul.f32 %v452, %v548
        %v837 = vmul.f32 %v453, %v549
        %v838 = vmul.f32 %v454, %v550
        %v839 = vmul.f32 %v455, %v551
        %v840 = vmul.f32 %v456, %v552
        %v841 = vmul.f32 %v457, %v553
        %v842 = vmul.f32 %v458, %v554
        %v843 = vmul.f32 %v459, %v555
        %v844 = vmul.f32 %v460, %v556
        %v845 = vmul.f32 %v461, %v557
        %v846 = vmul.f32 %v462, %v558
        %v847 = vmul.f32 %v463, %v559
        %v848 = vmul.f32 %v464, %v560
        %v849 = vmul.f32 %v465, %v561
        %v850 = vmul.f32 %v466, %v562
        %v851 = vmul.f32 %v467, %v563
        %v852 = vmul.f32 %v468, %v564
        %v853 = vmul.f32 %v469, %v565
        %v854 = vmul.f32 %v470, %v566
        %v855 = vmul.f32 %v471, %v567
        %v856 = vmul.f32 %v472, %v568
        %v857 = vmul.f32 %v473, %v569
        %v858 = vmul.f32 %v474, %v570
        %v859 = vmul.f32 %v475, %v571
        %v860 = vmul.f32 %v476, %v572
        %v861 = vmul.f32 %v477, %v573
        %v862 = vmul.f32 %v478, %v574
        %v863 = vmul.f32 %v479, %v575
        %v864 = vmul.f32 %v480, %v576
        %v865 = vmul.f32 %v481, %v577
        %v866 = vmul.f32 %v482, %v578
        %v867 = vmul.f32 %v483, %v579
        %v868 = vmul.f32 %v484, %v580
        %v869 = vmul.f32 %v485, %v581
        %v870 = vadd.f32 %v678, %v682
        %v871 = vadd.f32 %v870, %v686
        %v872 = vadd.f32 %v871, %v690
        %v873 = vadd.f32 %v872, %v694
        %v874 = vadd.f32 %v873, %v698
        %v875 = vadd.f32 %v874, %v702
        %v876 = vadd.f32 %v875, %v706
        %v877 = vadd.f32 %v876, %v710
        %v878 = vadd.f32 %v877, %v714
        %v879 = vadd.f32 %v878, %v718
        %v880 = vadd.f32 %v879, %v722
        %v881 = vadd.f32 %v880, %v726
        %v882 = vadd.f32 %v881, %v730
        %v883 = vadd.f32 %v882, %v734
        %v884 = vadd.f32 %v883, %v738
        %v885 = vadd.f32 %v884, %v742
        %v886 = vadd.f32 %v885, %v746
        %v887 = vadd.f32 %v886, %v750
        %v888 = vadd.f32 %v887, %v754
        %v889 = vadd.f32 %v888, %v758
        %v890 = vadd.f32 %v889, %v762
        %v891 = vadd.f32 %v890, %v766
        %v892 = vadd.f32 %v891, %v770
        %v893 = vrot.slane %v892, 4
        %v894 = vadd.f32 %v892, %v893
        %v895 = vrot.slane %v894, 2
        %v896 = vadd.f32 %v894, %v895
        %v897 = vrot.slane %v896, 1
        %v898 = vadd.f32 %v896, %v897
        %v899 = vadd.f32 %v679, %v683
        %v900 = vadd.f32 %v899, %v687
        %v901 = vadd.f32 %v900, %v691
        %v902 = vadd.f32 %v901, %v695
        %v903 = vadd.f32 %v902, %v699
        %v904 = vadd.f32 %v903, %v703
        %v905 = vadd.f32 %v904, %v707
        %v906 = vadd.f32 %v905, %v711
        %v907 = vadd.f32 %v906, %v715
        %v908 = vadd.f32 %v907, %v719
        %v909 = vadd.f32 %v908, %v723
        %v910 = vadd.f32 %v909, %v727
        %v911 = vadd.f32 %v910, %v731
        %v912 = vadd.f32 %v911, %v735
        %v913 = vadd.f32 %v912, %v739
        %v914 = vadd.f32 %v913, %v743
        %v915 = vadd.f32 %v914, %v747
        %v916 = vadd.f32 %v915, %v751
        %v917 = vadd.f32 %v916, %v755
        %v918 = vadd.f32 %v917, %v759
        %v919 = vadd.f32 %v918, %v763
        %v920 = vadd.f32 %v919, %v767
        %v921 = vadd.f32 %v920, %v771
        %v922 = vrot.slane %v921, 4
        %v923 = vadd.f32 %v921, %v922
        %v924 = vrot.slane %v923, 2
        %v925 = vadd.f32 %v923, %v924
        %v926 = vrot.slane %v925, 1
        %v927 = vadd.f32 %v925, %v926
        %v928 = vadd.f32 %v680, %v684
        %v929 = vadd.f32 %v928, %v688
        %v930 = vadd.f32 %v929, %v692
        %v931 = vadd.f32 %v930, %v696
        %v932 = vadd.f32 %v931, %v700
        %v933 = vadd.f32 %v932, %v704
        %v934 = vadd.f32 %v933, %v708
        %v935 = vadd.f32 %v934, %v712
        %v936 = vadd.f32 %v935, %v716
        %v937 = vadd.f32 %v936, %v720
        %v938 = vadd.f32 %v937, %v724
        %v939 = vadd.f32 %v938, %v728
        %v940 = vadd.f32 %v939, %v732
        %v941 = vadd.f32 %v940, %v736
        %v942 = vadd.f32 %v941, %v740
        %v943 = vadd.f32 %v942, %v744
        %v944 = vadd.f32 %v943, %v748
        %v945 = vadd.f32 %v944, %v752
        %v946 = vadd.f32 %v945, %v756
        %v947 = vadd.f32 %v946, %v760
        %v948 = vadd.f32 %v947, %v764
        %v949 = vadd.f32 %v948, %v768
        %v950 = vadd.f32 %v949, %v772
        %v951 = vrot.slane %v950, 4
        %v952 = vadd.f32 %v950, %v951
        %v953 = vrot.slane %v952, 2
        %v954 = vadd.f32 %v952, %v953
        %v955 = vrot.slane %v954, 1
        %v956 = vadd.f32 %v954, %v955
        %v957 = vadd.f32 %v681, %v685
        %v958 = vadd.f32 %v957, %v689
        %v959 = vadd.f32 %v958, %v693
        %v960 = vadd.f32 %v959, %v697
        %v961 = vadd.f32 %v960, %v701
        %v962 = vadd.f32 %v961, %v705
        %v963 = vadd.f32 %v962, %v709
        %v964 = vadd.f32 %v963, %v713
        %v965 = vadd.f32 %v964, %v717
        %v966 = vadd.f32 %v965, %v721
        %v967 = vadd.f32 %v966, %v725
        %v968 = vadd.f32 %v967, %v729
        %v969 = vadd.f32 %v968, %v733
        %v970 = vadd.f32 %v969, %v737
        %v971 = vadd.f32 %v970, %v741
        %v972 = vadd.f32 %v971, %v745
        %v973 = vadd.f32 %v972, %v749
        %v974 = vadd.f32 %v973, %v753
        %v975 = vadd.f32 %v974, %v757
        %v976 = vadd.f32 %v975, %v761
        %v977 = vadd.f32 %v976, %v765
        %v978 = vadd.f32 %v977, %v769
        %v979 = vadd.f32 %v978, %v773
        %v980 = vrot.slane %v979, 4
        %v981 = vadd.f32 %v979, %v980
        %v982 = vrot.slane %v981, 2
        %v983 = vadd.f32 %v981, %v982
        %v984 = vrot.slane %v983, 1
        %v985 = vadd.f32 %v983, %v984
        %v986 = vadd.f32 %v774, %v778
        %v987 = vadd.f32 %v986, %v782
        %v988 = vadd.f32 %v987, %v786
        %v989 = vadd.f32 %v988, %v790
        %v990 = vadd.f32 %v989, %v794
        %v991 = vadd.f32 %v990, %v798
        %v992 = vadd.f32 %v991, %v802
        %v993 = vadd.f32 %v992, %v806
        %v994 = vadd.f32 %v993, %v810
        %v995 = vadd.f32 %v994, %v814
        %v996 = vadd.f32 %v995, %v818
        %v997 = vadd.f32 %v996, %v822
        %v998 = vadd.f32 %v997, %v826
        %v999 = vadd.f32 %v998, %v830
        %v1000 = vadd.f32 %v999, %v834
        %v1001 = vadd.f32 %v1000, %v838
        %v1002 = vadd.f32 %v1001, %v842
        %v1003 = vadd.f32 %v1002, %v846
        %v1004 = vadd.f32 %v1003, %v850
        %v1005 = vadd.f32 %v1004, %v854
        %v1006 = vadd.f32 %v1005, %v858
        %v1007 = vadd.f32 %v1006, %v862
        %v1008 = vadd.f32 %v1007, %v866
        %v1009 = vrot.slane %v1008, 4
        %v1010 = vadd.f32 %v1008, %v1009
        %v1011 = vrot.slane %v1010, 2
        %v1012 = vadd.f32 %v1010, %v1011
        %v1013 = vrot.slane %v1012, 1
        %v1014 = vadd.f32 %v1012, %v1013
        %v1015 = vadd.f32 %v775, %v779
        %v1016 = vadd.f32 %v1015, %v783
        %v1017 = vadd.f32 %v1016, %v787
        %v1018 = vadd.f32 %v1017, %v791
        %v1019 = vadd.f32 %v1018, %v795
        %v1020 = vadd.f32 %v1019, %v799
        %v1021 = vadd.f32 %v1020, %v803
        %v1022 = vadd.f32 %v1021, %v807
        %v1023 = vadd.f32 %v1022, %v811
        %v1024 = vadd.f32 %v1023, %v815
        %v1025 = vadd.f32 %v1024, %v819
        %v1026 = vadd.f32 %v1025, %v823
        %v1027 = vadd.f32 %v1026, %v827
        %v1028 = vadd.f32 %v1027, %v831
        %v1029 = vadd.f32 %v1028, %v835
        %v1030 = vadd.f32 %v1029, %v839
        %v1031 = vadd.f32 %v1030, %v843
        %v1032 = vadd.f32 %v1031, %v847
        %v1033 = vadd.f32 %v1032, %v851
        %v1034 = vadd.f32 %v1033, %v855
        %v1035 = vadd.f32 %v1034, %v859
        %v1036 = vadd.f32 %v1035, %v863
        %v1037 = vadd.f32 %v1036, %v867
        %v1038 = vrot.slane %v1037, 4
        %v1039 = vadd.f32 %v1037, %v1038
        %v1040 = vrot.slane %v1039, 2
        %v1041 = vadd.f32 %v1039, %v1040
        %v1042 = vrot.slane %v1041, 1
        %v1043 = vadd.f32 %v1041, %v1042
        %v1044 = vadd.f32 %v776, %v780
        %v1045 = vadd.f32 %v1044, %v784
        %v1046 = vadd.f32 %v1045, %v788
        %v1047 = vadd.f32 %v1046, %v792
        %v1048 = vadd.f32 %v1047, %v796
        %v1049 = vadd.f32 %v1048, %v800
        %v1050 = vadd.f32 %v1049, %v804
        %v1051 = vadd.f32 %v1050, %v808
        %v1052 = vadd.f32 %v1051, %v812
        %v1053 = vadd.f32 %v1052, %v816
        %v1054 = vadd.f32 %v1053, %v820
        %v1055 = vadd.f32 %v1054, %v824
        %v1056 = vadd.f32 %v1055, %v828
        %v1057 = vadd.f32 %v1056, %v832
        %v1058 = vadd.f32 %v1057, %v836
        %v1059 = vadd.f32 %v1058, %v840
        %v1060 = vadd.f32 %v1059, %v844
        %v1061 = vadd.f32 %v1060, %v848
        %v1062 = vadd.f32 %v1061, %v852
        %v1063 = vadd.f32 %v1062, %v856
        %v1064 = vadd.f32 %v1063, %v860
        %v1065 = vadd.f32 %v1064, %v864
        %v1066 = vadd.f32 %v1065, %v868
        %v1067 = vrot.slane %v1066, 4
        %v1068 = vadd.f32 %v1066, %v1067
        %v1069 = vrot.slane %v1068, 2
        %v1070 = vadd.f32 %v1068, %v1069
        %v1071 = vrot.slane %v1070, 1
        %v1072 = vadd.f32 %v1070, %v1071
        %v1073 = vadd.f32 %v777, %v781
        %v1074 = vadd.f32 %v1073, %v785
        %v1075 = vadd.f32 %v1074, %v789
        %v1076 = vadd.f32 %v1075, %v793
        %v1077 = vadd.f32 %v1076, %v797
        %v1078 = vadd.f32 %v1077, %v801
        %v1079 = vadd.f32 %v1078, %v805
        %v1080 = vadd.f32 %v1079, %v809
        %v1081 = vadd.f32 %v1080, %v813
        %v1082 = vadd.f32 %v1081, %v817
        %v1083 = vadd.f32 %v1082, %v821
        %v1084 = vadd.f32 %v1083, %v825
        %v1085 = vadd.f32 %v1084, %v829
        %v1086 = vadd.f32 %v1085, %v833
        %v1087 = vadd.f32 %v1086, %v837
        %v1088 = vadd.f32 %v1087, %v841
        %v1089 = vadd.f32 %v1088, %v845
        %v1090 = vadd.f32 %v1089, %v849
        %v1091 = vadd.f32 %v1090, %v853
        %v1092 = vadd.f32 %v1091, %v857
        %v1093 = vadd.f32 %v1092, %v861
        %v1094 = vadd.f32 %v1093, %v865
        %v1095 = vadd.f32 %v1094, %v869
        %v1096 = vrot.slane %v1095, 4
        %v1097 = vadd.f32 %v1095, %v1096
        %v1098 = vrot.slane %v1097, 2
        %v1099 = vadd.f32 %v1097, %v1098
        %v1100 = vrot.slane %v1099, 1
        %v1101 = vadd.f32 %v1099, %v1100
        %vm1110 = vcmask 1041409
        %v1111 = vsel %vm1110, %v1014, %v898
        %v1112 = vsel %vm1110, %v1043, %v927
        %v1113 = vsel %vm1110, %v1072, %v956
        %v1114 = vsel %vm1110, %v1101, %v985
        %vm1119 = vcmask 1041408
        %v1120 = vsel %vm1119, %v1111, 0.0
        %v1121 = vsel %vm1119, %v1112, 0.0
        %v1122 = vadd.f32 %v1120, %v1121
        %v1123 = vsel %vm1119, %v1113, 0.0
        %v1124 = vadd.f32 %v1122, %v1123
        %v1125 = vsel %vm1119, %v1114, 0.0
        %v1126 = vadd.f32 %v1124, %v1125
        %1127 = vadd.xlane.f32.xlu0 %v1126
        %v1128 = vpop.xlane.xlu0 %1127
        %v1129 = vmul.f32 %v294, %v582
        %v1130 = vmul.f32 %v295, %v583
        %v1131 = vmul.f32 %v296, %v584
        %v1132 = vmul.f32 %v297, %v585
        %v1133 = vmul.f32 %v298, %v586
        %v1134 = vmul.f32 %v299, %v587
        %v1135 = vmul.f32 %v300, %v588
        %v1136 = vmul.f32 %v301, %v589
        %v1137 = vmul.f32 %v302, %v590
        %v1138 = vmul.f32 %v303, %v591
        %v1139 = vmul.f32 %v304, %v592
        %v1140 = vmul.f32 %v305, %v593
        %v1141 = vmul.f32 %v306, %v594
        %v1142 = vmul.f32 %v307, %v595
        %v1143 = vmul.f32 %v308, %v596
        %v1144 = vmul.f32 %v309, %v597
        %v1145 = vmul.f32 %v310, %v598
        %v1146 = vmul.f32 %v311, %v599
        %v1147 = vmul.f32 %v312, %v600
        %v1148 = vmul.f32 %v313, %v601
        %v1149 = vmul.f32 %v314, %v602
        %v1150 = vmul.f32 %v315, %v603
        %v1151 = vmul.f32 %v316, %v604
        %v1152 = vmul.f32 %v317, %v605
        %v1153 = vmul.f32 %v318, %v606
        %v1154 = vmul.f32 %v319, %v607
        %v1155 = vmul.f32 %v320, %v608
        %v1156 = vmul.f32 %v321, %v609
        %v1157 = vmul.f32 %v322, %v610
        %v1158 = vmul.f32 %v323, %v611
        %v1159 = vmul.f32 %v324, %v612
        %v1160 = vmul.f32 %v325, %v613
        %v1161 = vmul.f32 %v326, %v614
        %v1162 = vmul.f32 %v327, %v615
        %v1163 = vmul.f32 %v328, %v616
        %v1164 = vmul.f32 %v329, %v617
        %v1165 = vmul.f32 %v330, %v618
        %v1166 = vmul.f32 %v331, %v619
        %v1167 = vmul.f32 %v332, %v620
        %v1168 = vmul.f32 %v333, %v621
        %v1169 = vmul.f32 %v334, %v622
        %v1170 = vmul.f32 %v335, %v623
        %v1171 = vmul.f32 %v336, %v624
        %v1172 = vmul.f32 %v337, %v625
        %v1173 = vmul.f32 %v338, %v626
        %v1174 = vmul.f32 %v339, %v627
        %v1175 = vmul.f32 %v340, %v628
        %v1176 = vmul.f32 %v341, %v629
        %v1177 = vmul.f32 %v342, %v630
        %v1178 = vmul.f32 %v343, %v631
        %v1179 = vmul.f32 %v344, %v632
        %v1180 = vmul.f32 %v345, %v633
        %v1181 = vmul.f32 %v346, %v634
        %v1182 = vmul.f32 %v347, %v635
        %v1183 = vmul.f32 %v348, %v636
        %v1184 = vmul.f32 %v349, %v637
        %v1185 = vmul.f32 %v350, %v638
        %v1186 = vmul.f32 %v351, %v639
        %v1187 = vmul.f32 %v352, %v640
        %v1188 = vmul.f32 %v353, %v641
        %v1189 = vmul.f32 %v354, %v642
        %v1190 = vmul.f32 %v355, %v643
        %v1191 = vmul.f32 %v356, %v644
        %v1192 = vmul.f32 %v357, %v645
        %v1193 = vmul.f32 %v358, %v646
        %v1194 = vmul.f32 %v359, %v647
        %v1195 = vmul.f32 %v360, %v648
        %v1196 = vmul.f32 %v361, %v649
        %v1197 = vmul.f32 %v362, %v650
        %v1198 = vmul.f32 %v363, %v651
        %v1199 = vmul.f32 %v364, %v652
        %v1200 = vmul.f32 %v365, %v653
        %v1201 = vmul.f32 %v366, %v654
        %v1202 = vmul.f32 %v367, %v655
        %v1203 = vmul.f32 %v368, %v656
        %v1204 = vmul.f32 %v369, %v657
        %v1205 = vmul.f32 %v370, %v658
        %v1206 = vmul.f32 %v371, %v659
        %v1207 = vmul.f32 %v372, %v660
        %v1208 = vmul.f32 %v373, %v661
        %v1209 = vmul.f32 %v374, %v662
        %v1210 = vmul.f32 %v375, %v663
        %v1211 = vmul.f32 %v376, %v664
        %v1212 = vmul.f32 %v377, %v665
        %v1213 = vmul.f32 %v378, %v666
        %v1214 = vmul.f32 %v379, %v667
        %v1215 = vmul.f32 %v380, %v668
        %v1216 = vmul.f32 %v381, %v669
        %v1217 = vmul.f32 %v382, %v670
        %v1218 = vmul.f32 %v383, %v671
        %v1219 = vmul.f32 %v384, %v672
        %v1220 = vmul.f32 %v385, %v673
        %v1221 = vmul.f32 %v386, %v674
        %v1222 = vmul.f32 %v387, %v675
        %v1223 = vmul.f32 %v388, %v676
        %v1224 = vmul.f32 %v389, %v677
        %v1225 = vmul.f32 %v390, %v582
        %v1226 = vmul.f32 %v391, %v583
        %v1227 = vmul.f32 %v392, %v584
        %v1228 = vmul.f32 %v393, %v585
        %v1229 = vmul.f32 %v394, %v586
        %v1230 = vmul.f32 %v395, %v587
        %v1231 = vmul.f32 %v396, %v588
        %v1232 = vmul.f32 %v397, %v589
        %v1233 = vmul.f32 %v398, %v590
        %v1234 = vmul.f32 %v399, %v591
        %v1235 = vmul.f32 %v400, %v592
        %v1236 = vmul.f32 %v401, %v593
        %v1237 = vmul.f32 %v402, %v594
        %v1238 = vmul.f32 %v403, %v595
        %v1239 = vmul.f32 %v404, %v596
        %v1240 = vmul.f32 %v405, %v597
        %v1241 = vmul.f32 %v406, %v598
        %v1242 = vmul.f32 %v407, %v599
        %v1243 = vmul.f32 %v408, %v600
        %v1244 = vmul.f32 %v409, %v601
        %v1245 = vmul.f32 %v410, %v602
        %v1246 = vmul.f32 %v411, %v603
        %v1247 = vmul.f32 %v412, %v604
        %v1248 = vmul.f32 %v413, %v605
        %v1249 = vmul.f32 %v414, %v606
        %v1250 = vmul.f32 %v415, %v607
        %v1251 = vmul.f32 %v416, %v608
        %v1252 = vmul.f32 %v417, %v609
        %v1253 = vmul.f32 %v418, %v610
        %v1254 = vmul.f32 %v419, %v611
        %v1255 = vmul.f32 %v420, %v612
        %v1256 = vmul.f32 %v421, %v613
        %v1257 = vmul.f32 %v422, %v614
        %v1258 = vmul.f32 %v423, %v615
        %v1259 = vmul.f32 %v424, %v616
        %v1260 = vmul.f32 %v425, %v617
        %v1261 = vmul.f32 %v426, %v618
        %v1262 = vmul.f32 %v427, %v619
        %v1263 = vmul.f32 %v428, %v620
        %v1264 = vmul.f32 %v429, %v621
        %v1265 = vmul.f32 %v430, %v622
        %v1266 = vmul.f32 %v431, %v623
        %v1267 = vmul.f32 %v432, %v624
        %v1268 = vmul.f32 %v433, %v625
        %v1269 = vmul.f32 %v434, %v626
        %v1270 = vmul.f32 %v435, %v627
        %v1271 = vmul.f32 %v436, %v628
        %v1272 = vmul.f32 %v437, %v629
        %v1273 = vmul.f32 %v438, %v630
        %v1274 = vmul.f32 %v439, %v631
        %v1275 = vmul.f32 %v440, %v632
        %v1276 = vmul.f32 %v441, %v633
        %v1277 = vmul.f32 %v442, %v634
        %v1278 = vmul.f32 %v443, %v635
        %v1279 = vmul.f32 %v444, %v636
        %v1280 = vmul.f32 %v445, %v637
        %v1281 = vmul.f32 %v446, %v638
        %v1282 = vmul.f32 %v447, %v639
        %v1283 = vmul.f32 %v448, %v640
        %v1284 = vmul.f32 %v449, %v641
        %v1285 = vmul.f32 %v450, %v642
        %v1286 = vmul.f32 %v451, %v643
        %v1287 = vmul.f32 %v452, %v644
        %v1288 = vmul.f32 %v453, %v645
        %v1289 = vmul.f32 %v454, %v646
        %v1290 = vmul.f32 %v455, %v647
        %v1291 = vmul.f32 %v456, %v648
        %v1292 = vmul.f32 %v457, %v649
        %v1293 = vmul.f32 %v458, %v650
        %v1294 = vmul.f32 %v459, %v651
        %v1295 = vmul.f32 %v460, %v652
        %v1296 = vmul.f32 %v461, %v653
        %v1297 = vmul.f32 %v462, %v654
        %v1298 = vmul.f32 %v463, %v655
        %v1299 = vmul.f32 %v464, %v656
        %v1300 = vmul.f32 %v465, %v657
        %v1301 = vmul.f32 %v466, %v658
        %v1302 = vmul.f32 %v467, %v659
        %v1303 = vmul.f32 %v468, %v660
        %v1304 = vmul.f32 %v469, %v661
        %v1305 = vmul.f32 %v470, %v662
        %v1306 = vmul.f32 %v471, %v663
        %v1307 = vmul.f32 %v472, %v664
        %v1308 = vmul.f32 %v473, %v665
        %v1309 = vmul.f32 %v474, %v666
        %v1310 = vmul.f32 %v475, %v667
        %v1311 = vmul.f32 %v476, %v668
        %v1312 = vmul.f32 %v477, %v669
        %v1313 = vmul.f32 %v478, %v670
        %v1314 = vmul.f32 %v479, %v671
        %v1315 = vmul.f32 %v480, %v672
        %v1316 = vmul.f32 %v481, %v673
        %v1317 = vmul.f32 %v482, %v674
        %v1318 = vmul.f32 %v483, %v675
        %v1319 = vmul.f32 %v484, %v676
        %v1320 = vmul.f32 %v485, %v677
        %v1321 = vadd.f32 %v1129, %v1133
        %v1322 = vadd.f32 %v1321, %v1137
        %v1323 = vadd.f32 %v1322, %v1141
        %v1324 = vadd.f32 %v1323, %v1145
        %v1325 = vadd.f32 %v1324, %v1149
        %v1326 = vadd.f32 %v1325, %v1153
        %v1327 = vadd.f32 %v1326, %v1157
        %v1328 = vadd.f32 %v1327, %v1161
        %v1329 = vadd.f32 %v1328, %v1165
        %v1330 = vadd.f32 %v1329, %v1169
        %v1331 = vadd.f32 %v1330, %v1173
        %v1332 = vadd.f32 %v1331, %v1177
        %v1333 = vadd.f32 %v1332, %v1181
        %v1334 = vadd.f32 %v1333, %v1185
        %v1335 = vadd.f32 %v1334, %v1189
        %v1336 = vadd.f32 %v1335, %v1193
        %v1337 = vadd.f32 %v1336, %v1197
        %v1338 = vadd.f32 %v1337, %v1201
        %v1339 = vadd.f32 %v1338, %v1205
        %v1340 = vadd.f32 %v1339, %v1209
        %v1341 = vadd.f32 %v1340, %v1213
        %v1342 = vadd.f32 %v1341, %v1217
        %v1343 = vadd.f32 %v1342, %v1221
        %v1344 = vrot.slane %v1343, 4
        %v1345 = vadd.f32 %v1343, %v1344
        %v1346 = vrot.slane %v1345, 2
        %v1347 = vadd.f32 %v1345, %v1346
        %v1348 = vrot.slane %v1347, 1
        %v1349 = vadd.f32 %v1347, %v1348
        %v1350 = vadd.f32 %v1130, %v1134
        %v1351 = vadd.f32 %v1350, %v1138
        %v1352 = vadd.f32 %v1351, %v1142
        %v1353 = vadd.f32 %v1352, %v1146
        %v1354 = vadd.f32 %v1353, %v1150
        %v1355 = vadd.f32 %v1354, %v1154
        %v1356 = vadd.f32 %v1355, %v1158
        %v1357 = vadd.f32 %v1356, %v1162
        %v1358 = vadd.f32 %v1357, %v1166
        %v1359 = vadd.f32 %v1358, %v1170
        %v1360 = vadd.f32 %v1359, %v1174
        %v1361 = vadd.f32 %v1360, %v1178
        %v1362 = vadd.f32 %v1361, %v1182
        %v1363 = vadd.f32 %v1362, %v1186
        %v1364 = vadd.f32 %v1363, %v1190
        %v1365 = vadd.f32 %v1364, %v1194
        %v1366 = vadd.f32 %v1365, %v1198
        %v1367 = vadd.f32 %v1366, %v1202
        %v1368 = vadd.f32 %v1367, %v1206
        %v1369 = vadd.f32 %v1368, %v1210
        %v1370 = vadd.f32 %v1369, %v1214
        %v1371 = vadd.f32 %v1370, %v1218
        %v1372 = vadd.f32 %v1371, %v1222
        %v1373 = vrot.slane %v1372, 4
        %v1374 = vadd.f32 %v1372, %v1373
        %v1375 = vrot.slane %v1374, 2
        %v1376 = vadd.f32 %v1374, %v1375
        %v1377 = vrot.slane %v1376, 1
        %v1378 = vadd.f32 %v1376, %v1377
        %v1379 = vadd.f32 %v1131, %v1135
        %v1380 = vadd.f32 %v1379, %v1139
        %v1381 = vadd.f32 %v1380, %v1143
        %v1382 = vadd.f32 %v1381, %v1147
        %v1383 = vadd.f32 %v1382, %v1151
        %v1384 = vadd.f32 %v1383, %v1155
        %v1385 = vadd.f32 %v1384, %v1159
        %v1386 = vadd.f32 %v1385, %v1163
        %v1387 = vadd.f32 %v1386, %v1167
        %v1388 = vadd.f32 %v1387, %v1171
        %v1389 = vadd.f32 %v1388, %v1175
        %v1390 = vadd.f32 %v1389, %v1179
        %v1391 = vadd.f32 %v1390, %v1183
        %v1392 = vadd.f32 %v1391, %v1187
        %v1393 = vadd.f32 %v1392, %v1191
        %v1394 = vadd.f32 %v1393, %v1195
        %v1395 = vadd.f32 %v1394, %v1199
        %v1396 = vadd.f32 %v1395, %v1203
        %v1397 = vadd.f32 %v1396, %v1207
        %v1398 = vadd.f32 %v1397, %v1211
        %v1399 = vadd.f32 %v1398, %v1215
        %v1400 = vadd.f32 %v1399, %v1219
        %v1401 = vadd.f32 %v1400, %v1223
        %v1402 = vrot.slane %v1401, 4
        %v1403 = vadd.f32 %v1401, %v1402
        %v1404 = vrot.slane %v1403, 2
        %v1405 = vadd.f32 %v1403, %v1404
        %v1406 = vrot.slane %v1405, 1
        %v1407 = vadd.f32 %v1405, %v1406
        %v1408 = vadd.f32 %v1132, %v1136
        %v1409 = vadd.f32 %v1408, %v1140
        %v1410 = vadd.f32 %v1409, %v1144
        %v1411 = vadd.f32 %v1410, %v1148
        %v1412 = vadd.f32 %v1411, %v1152
        %v1413 = vadd.f32 %v1412, %v1156
        %v1414 = vadd.f32 %v1413, %v1160
        %v1415 = vadd.f32 %v1414, %v1164
        %v1416 = vadd.f32 %v1415, %v1168
        %v1417 = vadd.f32 %v1416, %v1172
        %v1418 = vadd.f32 %v1417, %v1176
        %v1419 = vadd.f32 %v1418, %v1180
        %v1420 = vadd.f32 %v1419, %v1184
        %v1421 = vadd.f32 %v1420, %v1188
        %v1422 = vadd.f32 %v1421, %v1192
        %v1423 = vadd.f32 %v1422, %v1196
        %v1424 = vadd.f32 %v1423, %v1200
        %v1425 = vadd.f32 %v1424, %v1204
        %v1426 = vadd.f32 %v1425, %v1208
        %v1427 = vadd.f32 %v1426, %v1212
        %v1428 = vadd.f32 %v1427, %v1216
        %v1429 = vadd.f32 %v1428, %v1220
        %v1430 = vadd.f32 %v1429, %v1224
        %v1431 = vrot.slane %v1430, 4
        %v1432 = vadd.f32 %v1430, %v1431
        %v1433 = vrot.slane %v1432, 2
        %v1434 = vadd.f32 %v1432, %v1433
        %v1435 = vrot.slane %v1434, 1
        %v1436 = vadd.f32 %v1434, %v1435
        %v1437 = vadd.f32 %v1225, %v1229
        %v1438 = vadd.f32 %v1437, %v1233
        %v1439 = vadd.f32 %v1438, %v1237
        %v1440 = vadd.f32 %v1439, %v1241
        %v1441 = vadd.f32 %v1440, %v1245
        %v1442 = vadd.f32 %v1441, %v1249
        %v1443 = vadd.f32 %v1442, %v1253
        %v1444 = vadd.f32 %v1443, %v1257
        %v1445 = vadd.f32 %v1444, %v1261
        %v1446 = vadd.f32 %v1445, %v1265
        %v1447 = vadd.f32 %v1446, %v1269
        %v1448 = vadd.f32 %v1447, %v1273
        %v1449 = vadd.f32 %v1448, %v1277
        %v1450 = vadd.f32 %v1449, %v1281
        %v1451 = vadd.f32 %v1450, %v1285
        %v1452 = vadd.f32 %v1451, %v1289
        %v1453 = vadd.f32 %v1452, %v1293
        %v1454 = vadd.f32 %v1453, %v1297
        %v1455 = vadd.f32 %v1454, %v1301
        %v1456 = vadd.f32 %v1455, %v1305
        %v1457 = vadd.f32 %v1456, %v1309
        %v1458 = vadd.f32 %v1457, %v1313
        %v1459 = vadd.f32 %v1458, %v1317
        %v1460 = vrot.slane %v1459, 4
        %v1461 = vadd.f32 %v1459, %v1460
        %v1462 = vrot.slane %v1461, 2
        %v1463 = vadd.f32 %v1461, %v1462
        %v1464 = vrot.slane %v1463, 1
        %v1465 = vadd.f32 %v1463, %v1464
        %v1466 = vadd.f32 %v1226, %v1230
        %v1467 = vadd.f32 %v1466, %v1234
        %v1468 = vadd.f32 %v1467, %v1238
        %v1469 = vadd.f32 %v1468, %v1242
        %v1470 = vadd.f32 %v1469, %v1246
        %v1471 = vadd.f32 %v1470, %v1250
        %v1472 = vadd.f32 %v1471, %v1254
        %v1473 = vadd.f32 %v1472, %v1258
        %v1474 = vadd.f32 %v1473, %v1262
        %v1475 = vadd.f32 %v1474, %v1266
        %v1476 = vadd.f32 %v1475, %v1270
        %v1477 = vadd.f32 %v1476, %v1274
        %v1478 = vadd.f32 %v1477, %v1278
        %v1479 = vadd.f32 %v1478, %v1282
        %v1480 = vadd.f32 %v1479, %v1286
        %v1481 = vadd.f32 %v1480, %v1290
        %v1482 = vadd.f32 %v1481, %v1294
        %v1483 = vadd.f32 %v1482, %v1298
        %v1484 = vadd.f32 %v1483, %v1302
        %v1485 = vadd.f32 %v1484, %v1306
        %v1486 = vadd.f32 %v1485, %v1310
        %v1487 = vadd.f32 %v1486, %v1314
        %v1488 = vadd.f32 %v1487, %v1318
        %v1489 = vrot.slane %v1488, 4
        %v1490 = vadd.f32 %v1488, %v1489
        %v1491 = vrot.slane %v1490, 2
        %v1492 = vadd.f32 %v1490, %v1491
        %v1493 = vrot.slane %v1492, 1
        %v1494 = vadd.f32 %v1492, %v1493
        %v1495 = vadd.f32 %v1227, %v1231
        %v1496 = vadd.f32 %v1495, %v1235
        %v1497 = vadd.f32 %v1496, %v1239
        %v1498 = vadd.f32 %v1497, %v1243
        %v1499 = vadd.f32 %v1498, %v1247
        %v1500 = vadd.f32 %v1499, %v1251
        %v1501 = vadd.f32 %v1500, %v1255
        %v1502 = vadd.f32 %v1501, %v1259
        %v1503 = vadd.f32 %v1502, %v1263
        %v1504 = vadd.f32 %v1503, %v1267
        %v1505 = vadd.f32 %v1504, %v1271
        %v1506 = vadd.f32 %v1505, %v1275
        %v1507 = vadd.f32 %v1506, %v1279
        %v1508 = vadd.f32 %v1507, %v1283
        %v1509 = vadd.f32 %v1508, %v1287
        %v1510 = vadd.f32 %v1509, %v1291
        %v1511 = vadd.f32 %v1510, %v1295
        %v1512 = vadd.f32 %v1511, %v1299
        %v1513 = vadd.f32 %v1512, %v1303
        %v1514 = vadd.f32 %v1513, %v1307
        %v1515 = vadd.f32 %v1514, %v1311
        %v1516 = vadd.f32 %v1515, %v1315
        %v1517 = vadd.f32 %v1516, %v1319
        %v1518 = vrot.slane %v1517, 4
        %v1519 = vadd.f32 %v1517, %v1518
        %v1520 = vrot.slane %v1519, 2
        %v1521 = vadd.f32 %v1519, %v1520
        %v1522 = vrot.slane %v1521, 1
        %v1523 = vadd.f32 %v1521, %v1522
        %v1524 = vadd.f32 %v1228, %v1232
        %v1525 = vadd.f32 %v1524, %v1236
        %v1526 = vadd.f32 %v1525, %v1240
        %v1527 = vadd.f32 %v1526, %v1244
        %v1528 = vadd.f32 %v1527, %v1248
        %v1529 = vadd.f32 %v1528, %v1252
        %v1530 = vadd.f32 %v1529, %v1256
        %v1531 = vadd.f32 %v1530, %v1260
        %v1532 = vadd.f32 %v1531, %v1264
        %v1533 = vadd.f32 %v1532, %v1268
        %v1534 = vadd.f32 %v1533, %v1272
        %v1535 = vadd.f32 %v1534, %v1276
        %v1536 = vadd.f32 %v1535, %v1280
        %v1537 = vadd.f32 %v1536, %v1284
        %v1538 = vadd.f32 %v1537, %v1288
        %v1539 = vadd.f32 %v1538, %v1292
        %v1540 = vadd.f32 %v1539, %v1296
        %v1541 = vadd.f32 %v1540, %v1300
        %v1542 = vadd.f32 %v1541, %v1304
        %v1543 = vadd.f32 %v1542, %v1308
        %v1544 = vadd.f32 %v1543, %v1312
        %v1545 = vadd.f32 %v1544, %v1316
        %v1546 = vadd.f32 %v1545, %v1320
        %v1547 = vrot.slane %v1546, 4
        %v1548 = vadd.f32 %v1546, %v1547
        %v1549 = vrot.slane %v1548, 2
        %v1550 = vadd.f32 %v1548, %v1549
        %v1551 = vrot.slane %v1550, 1
        %v1552 = vadd.f32 %v1550, %v1551
        %v1561 = vsel %vm1110, %v1465, %v1349
        %v1562 = vsel %vm1110, %v1494, %v1378
        %v1563 = vsel %vm1110, %v1523, %v1407
        %v1564 = vsel %vm1110, %v1552, %v1436
        %v1569 = vsel %vm1119, %v1561, 0.0
        %v1570 = vsel %vm1119, %v1562, 0.0
        %v1571 = vadd.f32 %v1569, %v1570
        %v1572 = vsel %vm1119, %v1563, 0.0
        %v1573 = vadd.f32 %v1571, %v1572
        %v1574 = vsel %vm1119, %v1564, 0.0
        %v1575 = vadd.f32 %v1573, %v1574
        %1576 = vadd.xlane.f32.xlu0 %v1575
        %v1577 = vpop.xlane.xlu0 %1576
        %v1578 = vld [vmem:[#allocation2] sm:$0x3]
        %vm1579 = vcmask 7168
        %v1580 = vsel %vm1579, %v1128, %v1577
        %v1581 = vadd.f32 %v1578, %v1580
        %vm1582 = vcmask 9216
        %1583 = vst.msk [vmem:[#allocation2] sm:$0x3] %vm1582, %v1581
        %p1584 = scmp.eq.s32.totalorder %s27, 3
        // Predicated region
        $region41: #{tpu_custom_call.1} parent=27 // pred_check
          %p1585 = pneg %p1584
        $region42: #{tpu_custom_call.1} parent=27 // pred_check_branch
          %1587 = sbr.rel (%p1585) target = $region44
        $region43: #{tpu_custom_call.1} parent=27 // pred_region
          %v1588 = vld [vmem:[#allocation2] sm:$0x3]
          %1589 = vst.msk [vmem:[%s281] sm:$0x3] %vm1582, %v1588
        $region44: #{tpu_custom_call.1} parent=27 // pred_fallthru
          _
        %s1590 = sand.u32 %s102, 1
        %s1591 = scalar_lea.sflag [#allocation5], %s1590
        %s1592 = sand.u32 %s102, 1
        %s1593 = smul.addr %s1592, 2
        %s1594 = scalar_lea.vmem [#allocation8], %s1593
        // Predicated region
        $region45: #{tpu_custom_call.1} parent=27 // pred_check
          %p1595 = pneg %p112
        $region46: #{tpu_custom_call.1} parent=27 // pred_check_branch
          %1597 = sbr.rel (%p1595) target = $region48
        $region47: #{tpu_custom_call.1} parent=27 // pred_region
          %1599 = vsyncadd %s1591, 0
          %s1600 = smul.addr %s26, 2
          %s1601 = scalar_lea.hbm %s2, %s1600
          %s1603 = sshll.u32 %s1594, 4
          %s1604 = int_to_ptr.vmem [resolvable:$true] %s1603
          %s1605 = sshll.u32 %s1601, 4
          %s1606 = int_to_ptr.hbm [resolvable:$true] %s1605
          %1608 = dma.vmem_to_hbm [thread:$0]  %s1604, 32, %s1606, %s1591
        $region48: #{tpu_custom_call.1} parent=27 // pred_fallthru
          _
      $region28: #{tpu_custom_call.1} parent=5 // pred_fallthru
        _
      %p1609 = scmp.le.s32.totalorder 2, %s17
      // Predicated region
      $region49: #{tpu_custom_call.1} parent=5 // pred_check
        %p1610 = pneg %p1609
      $region50: #{tpu_custom_call.1} parent=5 // pred_check_branch
        %1612 = sbr.rel (%p1610) target = $region52
      $region51: #{tpu_custom_call.1} parent=5 // pred_region
        %s1613 = ssub.s32 %s17, 2
        // Predicated region
        $region53: #{tpu_custom_call.1} parent=51 // pred_check
          %p1614 = pneg %p118
        $region54: #{tpu_custom_call.1} parent=51 // pred_check_branch
          %1616 = sbr.rel (%p1614) target = $region56
        $region55: #{tpu_custom_call.1} parent=51 // pred_region
          %s1617 = sand.u32 %s103, 1
          %s1618 = scalar_lea.sflag [#allocation5], %s1617
          %s1619 = sand.u32 %s103, 1
          %s1620 = smul.addr %s1619, 2
          %s1621 = scalar_lea.vmem [#allocation8], %s1620
          %1623 = dma.done %s1618, 32
        $region56: #{tpu_custom_call.1} parent=51 // pred_fallthru
          _
      $region52: #{tpu_custom_call.1} parent=5 // pred_fallthru
        _
    $region6: #{tpu_custom_call.1} parent=1 // loop_footer
      %s21 = sadd.s32 1, %s17
    $region7: #{tpu_custom_call.1} parent=1 // loop_footer_branch
      %16 = sbr.rel target = $region3
    $region8: #{tpu_custom_call.1} parent=1 // loop_exit
      _
    %1624 = vsyncpa [#allocation4], 1
    %s1625 = scalar_lea.sflag [#allocation4], 1
    %1626 = vsyncpa %s1625, 1
    %1627 = vsyncpa [#allocation7], 1
    %s1628 = scalar_lea.sflag [#allocation7], 1
    %1629 = vsyncpa %s1628, 1
    %1630 = vsyncpa [#allocation5], 1
    %s1631 = scalar_lea.sflag [#allocation5], 1
    %1632 = vsyncpa %s1631, 1

</llo_original>
